<compile_context>
chip_gen: v7x
topology: tpu7x:2x2x1
jax: 0.10.0
libtpu: 0.0.40
codegen_flags: <defaults>
</compile_context>

<pallas_src>
import functools

import numpy as np
import jax
import jax.numpy as jnp
from jax.experimental import pallas as pl
from jax.experimental.pallas import tpu as pltpu


def _struct_loss_kernel(pred_ref, mask_ref, ah_ref, aw_ref, out_ref,
                        bce_acc, wiou_acc, *, inv_nhw, inv_nb):
    t = pl.program_id(0)

    @pl.when(t == 0)
    def _init():
        bce_acc[...] = jnp.zeros((1, 1), jnp.float32)
        wiou_acc[...] = jnp.zeros((1, 1), jnp.float32)

    ah = ah_ref[...]            # (H, H) banded 0/1, resident across the grid
    aw = aw_ref[...]            # (W, W) banded 0/1, resident across the grid
    tb, h, w = pred_ref.shape

    # --- 31x31 avg pool, W direction: one large-M (TB*H, W) @ (W, W) matmul --
    mask_all = mask_ref[...].astype(jnp.float32)                    # (TB, H, W)
    win_flat = jnp.dot(mask_all.reshape(tb * h, w), aw,
                       preferred_element_type=jnp.float32)          # (TB*H, W)

    bce_part = jnp.zeros((1, 1), jnp.float32)
    wiou_part = jnp.zeros((1, 1), jnp.float32)

    # Static unroll over the (small) batch tile; every matmul stays 2D.
    for i in range(tb):
        mask_i = mask_ref[i].astype(jnp.float32)                    # (H, W)
        pred_i = pred_ref[i].astype(jnp.float32)                    # (H, W)

        # --- H direction of the pool: (H, H) @ (H, W) on the MXU -------------
        win_i = win_flat[i * h:(i + 1) * h, :]
        avg = jnp.dot(ah, win_i,
                      preferred_element_type=jnp.float32) * (1.0 / (31.0 * 31.0))

        weit = 1.0 + 5.0 * jnp.abs(avg - mask_i)

        # --- stable BCE-with-logits; reuse exp(-|x|) for the sigmoid ----------
        e = jnp.exp(-jnp.abs(pred_i))
        bce = jnp.maximum(pred_i, 0.0) - pred_i * mask_i + jnp.log(1.0 + e)
        inv1pe = 1.0 / (1.0 + e)
        sig = jnp.where(pred_i >= 0.0, inv1pe, e * inv1pe)

        # --- weighted IoU for this image --------------------------------------
        inter = jnp.sum(sig * mask_i * weit)
        union = jnp.sum((sig + mask_i) * weit)
        wiou = 1.0 - (inter + 1.0) / (union - inter + 1.0)

        bce_part = bce_part + jnp.sum(bce)
        wiou_part = wiou_part + wiou

    bce_acc[...] += bce_part
    wiou_acc[...] += wiou_part

    # Output block index is constant across the grid, so HBM writeback happens
    # once at the end with the fully accumulated value.
    out_ref[...] = bce_acc[...] * inv_nhw + wiou_acc[...] * inv_nb


def _pick_tile_b(b, h, w, budget_bytes=24 * 1024 * 1024):
    # ~2 inputs x 2 pipeline buffers + mask copy + pooled intermediate +
    # ~4 live per-image temporaries  ->  ~10 f32 arrays of tile size.
    per_b = 10 * h * w * 4
    for cand in (8, 4, 2, 1):
        if b % cand == 0 and cand * per_b <= budget_bytes:
            return cand
    return 1


def struct_loss(pred, mask, tile_b=None):
    """pred, mask: (N, C, H, W) float32 logits / targets (NCHW, like PyTorch)."""
    n, c, h, w = pred.shape
    b = n * c
    p = pred.reshape(b, h, w).astype(jnp.float32)
    m = mask.reshape(b, h, w).astype(jnp.float32)

    if tile_b is None:
        tile_b = _pick_tile_b(b, h, w)
    assert b % tile_b == 0, (b, tile_b)
    num_tiles = b // tile_b

    # Banded 0/1 pooling matrices, built once as host constants.
    pad = 15
    ih = np.arange(h)
    iw = np.arange(w)
    ah = jnp.asarray((np.abs(ih[:, None] - ih[None, :]) <= pad).astype(np.float32))
    aw = jnp.asarray((np.abs(iw[:, None] - iw[None, :]) <= pad).astype(np.float32))

    kernel = functools.partial(_struct_loss_kernel,
                               inv_nhw=1.0 / float(b * h * w),
                               inv_nb=1.0 / float(b))

    cost = pl.CostEstimate(
        flops=int(2 * b * (h * h * w + h * w * w) + 25 * b * h * w),
        transcendentals=int(2 * b * h * w),
        bytes_accessed=int(8 * b * h * w + 4 * (h * h + w * w) + 4),
    )

    out = pl.pallas_call(
        kernel,
        out_shape=jax.ShapeDtypeStruct((1, 1), jnp.float32),
        grid=(num_tiles,),
        in_specs=[
            pl.BlockSpec((tile_b, h, w), lambda i: (i, 0, 0)),
            pl.BlockSpec((tile_b, h, w), lambda i: (i, 0, 0)),
            pl.BlockSpec((h, h), lambda i: (0, 0)),    # resident across grid
            pl.BlockSpec((w, w), lambda i: (0, 0)),    # resident across grid
        ],
        out_specs=pl.BlockSpec((1, 1), lambda i: (0, 0)),
        scratch_shapes=[pltpu.VMEM((1, 1), jnp.float32),   # running sum(bce)
                        pltpu.VMEM((1, 1), jnp.float32)],  # running sum(wiou)
        compiler_params=pltpu.CompilerParams(
            dimension_semantics=("arbitrary",),   # scalar accumulators carried
            vmem_limit_bytes=32 * 1024 * 1024),
        cost_estimate=cost,
    )(p, m, ah, aw)
    return out[0, 0]


def struct_loss_reference(pred, mask):
    """Pure-JAX reference mirroring the PyTorch forward (for validation)."""
    pad = 15
    h, w = pred.shape[2], pred.shape[3]
    ih = jnp.arange(h)
    iw = jnp.arange(w)
    ah = (jnp.abs(ih[:, None] - ih[None, :]) <= pad).astype(jnp.float32)
    aw = (jnp.abs(iw[:, None] - iw[None, :]) <= pad).astype(jnp.float32)
    avg = jnp.einsum('hk,nckw,wj->nchj', ah, mask, aw) / (31.0 * 31.0)
    weit = 1.0 + 5.0 * jnp.abs(avg - mask)
    bce = (jnp.maximum(pred, 0.0) - pred * mask
           + jnp.log(1.0 + jnp.exp(-jnp.abs(pred))))
    bce_mean = jnp.mean(bce)  # legacy reduce='none' -> scalar mean
    wbce = (weit * bce_mean).sum(axis=(2, 3)) / weit.sum(axis=(2, 3))
    sig = 1.0 / (1.0 + jnp.exp(-pred))
    inter = (sig * mask * weit).sum(axis=(2, 3))
    union = ((sig + mask) * weit).sum(axis=(2, 3))
    wiou = 1.0 - (inter + 1.0) / (union - inter + 1.0)
    return jnp.mean(wbce + wiou)


if __name__ == "__main__":
    key = jax.random.PRNGKey(0)
    k1, k2 = jax.random.split(key)
    N, C, H, W = 2, 4, 16, 16
    pred = jax.random.normal(k1, (N, C, H, W), dtype=jnp.float32)
    mask = (jax.random.uniform(k2, (N, C, H, W)) > 0.5).astype(jnp.float32)

    ref = jax.block_until_ready(struct_loss_reference(pred, mask))

    # Default tile choice (single tile at this small size) ...
    loss = jax.block_until_ready(struct_loss(pred, mask))
    # ... and an explicitly tiled run exercising the multi-step accumulator /
    # pipelined path (grid = (4,)).
    loss_tiled = jax.block_until_ready(struct_loss(pred, mask, tile_b=2))

    for val in (loss, loss_tiled):
        assert jnp.isfinite(val), "non-finite loss"
        assert jnp.allclose(val, ref, rtol=1e-5, atol=1e-5), (float(val), float(ref))
    print("KERNEL_OK")
</pallas_src>

<mosaic_0001>
module attributes {stable_mosaic.version = 11 : i64} {
  func.func @_struct_loss_kernel(%arg0: i32, %arg1: memref<8x16x16xf32, #tpu.memory_space<vmem>>, %arg2: memref<8x16x16xf32, #tpu.memory_space<vmem>>, %arg3: memref<16x16xf32, #tpu.memory_space<vmem>>, %arg4: memref<16x16xf32, #tpu.memory_space<vmem>>, %arg5: memref<1x1xf32, #tpu.memory_space<vmem>>, %arg6: memref<1x1xf32, #tpu.memory_space<vmem>>, %arg7: memref<1x1xf32, #tpu.memory_space<vmem>>) attributes {dimension_semantics = [#tpu.dimension_semantics<arbitrary>], iteration_bounds = array<i64: 1>, scalar_prefetch = 0 : i64, scratch_operands = 2 : i64, tpu.core_type = #tpu.core_type<tc>, window_params = [{transform_indices = @transform_0, window_bounds = array<i64: 8, 16, 16>}, {transform_indices = @transform_1, window_bounds = array<i64: 8, 16, 16>}, {pipeline_mode = #tpu.pipeline_mode<synchronous>, transform_indices = @transform_2, window_bounds = array<i64: 16, 16>}, {pipeline_mode = #tpu.pipeline_mode<synchronous>, transform_indices = @transform_3, window_bounds = array<i64: 16, 16>}, {pipeline_mode = #tpu.pipeline_mode<synchronous>, transform_indices = @transform_4, window_bounds = array<i64: 1, 1>}]} {
    %c0_i32 = arith.constant 0 : i32
    %0 = arith.cmpi eq, %arg0, %c0_i32 : i32
    %1 = arith.extui %0 : i1 to i32
    %c0_i32_0 = arith.constant 0 : i32
    %2 = arith.cmpi ne, %1, %c0_i32_0 : i32
    scf.if %2 {
      %cst_194 = arith.constant 0.000000e+00 : f32
      %496 = vector.broadcast %cst_194 : f32 to vector<1x1xf32>
      %c0_195 = arith.constant 0 : index
      %c0_196 = arith.constant 0 : index
      %497 = vector.load %arg6[%c0_195, %c0_196] : memref<1x1xf32, #tpu.memory_space<vmem>>, vector<1x1xf32>
      tpu.vector_store %arg6[%c0_195, %c0_196], %496 {strides = array<i32>} : memref<1x1xf32, #tpu.memory_space<vmem>>, vector<1x1xf32>,
      %cst_197 = arith.constant 0.000000e+00 : f32
      %498 = vector.broadcast %cst_197 : f32 to vector<1x1xf32>
      %c0_198 = arith.constant 0 : index
      %c0_199 = arith.constant 0 : index
      %499 = vector.load %arg7[%c0_198, %c0_199] : memref<1x1xf32, #tpu.memory_space<vmem>>, vector<1x1xf32>
      tpu.vector_store %arg7[%c0_198, %c0_199], %498 {strides = array<i32>} : memref<1x1xf32, #tpu.memory_space<vmem>>, vector<1x1xf32>,
    } else {
    }
    %c0 = arith.constant 0 : index
    %c0_1 = arith.constant 0 : index
    %3 = vector.load %arg3[%c0, %c0_1] : memref<16x16xf32, #tpu.memory_space<vmem>>, vector<16x16xf32>
    %c0_2 = arith.constant 0 : index
    %c0_3 = arith.constant 0 : index
    %4 = vector.load %arg4[%c0_2, %c0_3] : memref<16x16xf32, #tpu.memory_space<vmem>>, vector<16x16xf32>
    %c0_4 = arith.constant 0 : index
    %c0_5 = arith.constant 0 : index
    %c0_6 = arith.constant 0 : index
    %5 = vector.load %arg2[%c0_4, %c0_5, %c0_6] : memref<8x16x16xf32, #tpu.memory_space<vmem>>, vector<8x16x16xf32>
    %6 = vector.shape_cast %5 : vector<8x16x16xf32> to vector<128x16xf32>
    %cst = arith.constant dense<0.000000e+00> : vector<128x16xf32>
    %7 = tpu.matmul %6, %4, %cst {dimension_numbers = #tpu.dot_dimension_numbers<[1], [0], [0], [1], [0, 0, 1, 1], [], []>} : vector<128x16xf32>, vector<16x16xf32>, vector<128x16xf32> -> vector<128x16xf32>
    %cst_7 = arith.constant 0.000000e+00 : f32
    %8 = vector.broadcast %cst_7 : f32 to vector<1x1xf32>
    %cst_8 = arith.constant 0.000000e+00 : f32
    %9 = vector.broadcast %cst_8 : f32 to vector<1x1xf32>
    %c0_9 = arith.constant 0 : index
    %c0_10 = arith.constant 0 : index
    %c0_11 = arith.constant 0 : index
    %10 = vector.load %arg2[%c0_9, %c0_10, %c0_11] : memref<8x16x16xf32, #tpu.memory_space<vmem>>, vector<1x16x16xf32>
    %11 = vector.shape_cast %10 : vector<1x16x16xf32> to vector<16x16xf32>
    %c0_12 = arith.constant 0 : index
    %c0_13 = arith.constant 0 : index
    %c0_14 = arith.constant 0 : index
    %12 = vector.load %arg1[%c0_12, %c0_13, %c0_14] : memref<8x16x16xf32, #tpu.memory_space<vmem>>, vector<1x16x16xf32>
    %13 = vector.shape_cast %12 : vector<1x16x16xf32> to vector<16x16xf32>
    %14 = vector.extract_strided_slice %7 {offsets = [0, 0], sizes = [16, 16], strides = [1, 1]} : vector<128x16xf32> to vector<16x16xf32>
    %cst_15 = arith.constant dense<0.000000e+00> : vector<16x16xf32>
    %15 = tpu.matmul %3, %14, %cst_15 {dimension_numbers = #tpu.dot_dimension_numbers<[1], [0], [0], [1], [0, 0, 1, 1], [], []>} : vector<16x16xf32>, vector<16x16xf32>, vector<16x16xf32> -> vector<16x16xf32>
    %cst_16 = arith.constant 0.00104058278 : f32
    %16 = vector.broadcast %cst_16 : f32 to vector<16x16xf32>
    %17 = arith.mulf %15, %16 : vector<16x16xf32>
    %18 = arith.subf %17, %11 : vector<16x16xf32>
    %19 = math.absf %18 : vector<16x16xf32>
    %cst_17 = arith.constant 5.000000e+00 : f32
    %20 = vector.broadcast %cst_17 : f32 to vector<16x16xf32>
    %21 = arith.mulf %20, %19 : vector<16x16xf32>
    %cst_18 = arith.constant 1.000000e+00 : f32
    %22 = vector.broadcast %cst_18 : f32 to vector<16x16xf32>
    %23 = arith.addf %22, %21 : vector<16x16xf32>
    %24 = math.absf %13 : vector<16x16xf32>
    %cst_19 = arith.constant 0.000000e+00 : f32
    %25 = vector.broadcast %cst_19 : f32 to vector<16x16xf32>
    %26 = arith.subf %25, %24 : vector<16x16xf32>
    %27 = math.exp %26 : vector<16x16xf32>
    %cst_20 = arith.constant 0.000000e+00 : f32
    %28 = vector.broadcast %cst_20 : f32 to vector<16x16xf32>
    %29 = arith.maximumf %13, %28 : vector<16x16xf32>
    %30 = arith.mulf %13, %11 : vector<16x16xf32>
    %31 = arith.subf %29, %30 : vector<16x16xf32>
    %cst_21 = arith.constant 1.000000e+00 : f32
    %32 = vector.broadcast %cst_21 : f32 to vector<16x16xf32>
    %33 = arith.addf %32, %27 : vector<16x16xf32>
    %34 = math.log %33 : vector<16x16xf32>
    %35 = arith.addf %31, %34 : vector<16x16xf32>
    %cst_22 = arith.constant 1.000000e+00 : f32
    %36 = vector.broadcast %cst_22 : f32 to vector<16x16xf32>
    %37 = arith.addf %36, %27 : vector<16x16xf32>
    %cst_23 = arith.constant 1.000000e+00 : f32
    %38 = vector.broadcast %cst_23 : f32 to vector<16x16xf32>
    %39 = arith.divf %38, %37 : vector<16x16xf32>
    %cst_24 = arith.constant 0.000000e+00 : f32
    %40 = vector.broadcast %cst_24 : f32 to vector<16x16xf32>
    %41 = arith.cmpf oge, %13, %40 : vector<16x16xf32>
    %42 = arith.mulf %27, %39 : vector<16x16xf32>
    %43 = arith.select %41, %39, %42 : vector<16x16xi1>, vector<16x16xf32>
    %44 = arith.mulf %43, %11 : vector<16x16xf32>
    %45 = arith.mulf %44, %23 : vector<16x16xf32>
    %46 = vector.shape_cast %45 : vector<16x16xf32> to vector<1x16x16xf32>
    %cst_25 = arith.constant dense<0.000000e+00> : vector<1xf32>
    %47 = vector.multi_reduction <add>, %46, %cst_25 [1, 2] : vector<1x16x16xf32> to vector<1xf32>
    %48 = vector.shape_cast %47 : vector<1xf32> to vector<1x1x1xf32>
    %49 = vector.extract %48[0, 0, 0] : f32 from vector<1x1x1xf32>
    %50 = arith.addf %43, %11 : vector<16x16xf32>
    %51 = arith.mulf %50, %23 : vector<16x16xf32>
    %52 = vector.shape_cast %51 : vector<16x16xf32> to vector<1x16x16xf32>
    %cst_26 = arith.constant dense<0.000000e+00> : vector<1xf32>
    %53 = vector.multi_reduction <add>, %52, %cst_26 [1, 2] : vector<1x16x16xf32> to vector<1xf32>
    %54 = vector.shape_cast %53 : vector<1xf32> to vector<1x1x1xf32>
    %55 = vector.extract %54[0, 0, 0] : f32 from vector<1x1x1xf32>
    %cst_27 = arith.constant 1.000000e+00 : f32
    %56 = arith.addf %49, %cst_27 : f32
    %57 = arith.subf %55, %49 : f32
    %cst_28 = arith.constant 1.000000e+00 : f32
    %58 = arith.addf %57, %cst_28 : f32
    %59 = arith.divf %56, %58 : f32
    %cst_29 = arith.constant 1.000000e+00 : f32
    %60 = arith.subf %cst_29, %59 : f32
    %61 = vector.shape_cast %35 : vector<16x16xf32> to vector<1x16x16xf32>
    %cst_30 = arith.constant dense<0.000000e+00> : vector<1xf32>
    %62 = vector.multi_reduction <add>, %61, %cst_30 [1, 2] : vector<1x16x16xf32> to vector<1xf32>
    %63 = vector.shape_cast %62 : vector<1xf32> to vector<1x1x1xf32>
    %64 = vector.extract %63[0, 0, 0] : f32 from vector<1x1x1xf32>
    %65 = vector.broadcast %64 : f32 to vector<1x1xf32>
    %66 = arith.addf %8, %65 : vector<1x1xf32>
    %67 = vector.broadcast %60 : f32 to vector<1x1xf32>
    %68 = arith.addf %9, %67 : vector<1x1xf32>
    %c1 = arith.constant 1 : index
    %c0_31 = arith.constant 0 : index
    %c0_32 = arith.constant 0 : index
    %69 = vector.load %arg2[%c1, %c0_31, %c0_32] : memref<8x16x16xf32, #tpu.memory_space<vmem>>, vector<1x16x16xf32>
    %70 = vector.shape_cast %69 : vector<1x16x16xf32> to vector<16x16xf32>
    %c1_33 = arith.constant 1 : index
    %c0_34 = arith.constant 0 : index
    %c0_35 = arith.constant 0 : index
    %71 = vector.load %arg1[%c1_33, %c0_34, %c0_35] : memref<8x16x16xf32, #tpu.memory_space<vmem>>, vector<1x16x16xf32>
    %72 = vector.shape_cast %71 : vector<1x16x16xf32> to vector<16x16xf32>
    %73 = vector.extract_strided_slice %7 {offsets = [16, 0], sizes = [16, 16], strides = [1, 1]} : vector<128x16xf32> to vector<16x16xf32>
    %cst_36 = arith.constant dense<0.000000e+00> : vector<16x16xf32>
    %74 = tpu.matmul %3, %73, %cst_36 {dimension_numbers = #tpu.dot_dimension_numbers<[1], [0], [0], [1], [0, 0, 1, 1], [], []>} : vector<16x16xf32>, vector<16x16xf32>, vector<16x16xf32> -> vector<16x16xf32>
    %cst_37 = arith.constant 0.00104058278 : f32
    %75 = vector.broadcast %cst_37 : f32 to vector<16x16xf32>
    %76 = arith.mulf %74, %75 : vector<16x16xf32>
    %77 = arith.subf %76, %70 : vector<16x16xf32>
    %78 = math.absf %77 : vector<16x16xf32>
    %cst_38 = arith.constant 5.000000e+00 : f32
    %79 = vector.broadcast %cst_38 : f32 to vector<16x16xf32>
    %80 = arith.mulf %79, %78 : vector<16x16xf32>
    %cst_39 = arith.constant 1.000000e+00 : f32
    %81 = vector.broadcast %cst_39 : f32 to vector<16x16xf32>
    %82 = arith.addf %81, %80 : vector<16x16xf32>
    %83 = math.absf %72 : vector<16x16xf32>
    %cst_40 = arith.constant 0.000000e+00 : f32
    %84 = vector.broadcast %cst_40 : f32 to vector<16x16xf32>
    %85 = arith.subf %84, %83 : vector<16x16xf32>
    %86 = math.exp %85 : vector<16x16xf32>
    %cst_41 = arith.constant 0.000000e+00 : f32
    %87 = vector.broadcast %cst_41 : f32 to vector<16x16xf32>
    %88 = arith.maximumf %72, %87 : vector<16x16xf32>
    %89 = arith.mulf %72, %70 : vector<16x16xf32>
    %90 = arith.subf %88, %89 : vector<16x16xf32>
    %cst_42 = arith.constant 1.000000e+00 : f32
    %91 = vector.broadcast %cst_42 : f32 to vector<16x16xf32>
    %92 = arith.addf %91, %86 : vector<16x16xf32>
    %93 = math.log %92 : vector<16x16xf32>
    %94 = arith.addf %90, %93 : vector<16x16xf32>
    %cst_43 = arith.constant 1.000000e+00 : f32
    %95 = vector.broadcast %cst_43 : f32 to vector<16x16xf32>
    %96 = arith.addf %95, %86 : vector<16x16xf32>
    %cst_44 = arith.constant 1.000000e+00 : f32
    %97 = vector.broadcast %cst_44 : f32 to vector<16x16xf32>
    %98 = arith.divf %97, %96 : vector<16x16xf32>
    %cst_45 = arith.constant 0.000000e+00 : f32
    %99 = vector.broadcast %cst_45 : f32 to vector<16x16xf32>
    %100 = arith.cmpf oge, %72, %99 : vector<16x16xf32>
    %101 = arith.mulf %86, %98 : vector<16x16xf32>
    %102 = arith.select %100, %98, %101 : vector<16x16xi1>, vector<16x16xf32>
    %103 = arith.mulf %102, %70 : vector<16x16xf32>
    %104 = arith.mulf %103, %82 : vector<16x16xf32>
    %105 = vector.shape_cast %104 : vector<16x16xf32> to vector<1x16x16xf32>
    %cst_46 = arith.constant dense<0.000000e+00> : vector<1xf32>
    %106 = vector.multi_reduction <add>, %105, %cst_46 [1, 2] : vector<1x16x16xf32> to vector<1xf32>
    %107 = vector.shape_cast %106 : vector<1xf32> to vector<1x1x1xf32>
    %108 = vector.extract %107[0, 0, 0] : f32 from vector<1x1x1xf32>
    %109 = arith.addf %102, %70 : vector<16x16xf32>
    %110 = arith.mulf %109, %82 : vector<16x16xf32>
    %111 = vector.shape_cast %110 : vector<16x16xf32> to vector<1x16x16xf32>
    %cst_47 = arith.constant dense<0.000000e+00> : vector<1xf32>
    %112 = vector.multi_reduction <add>, %111, %cst_47 [1, 2] : vector<1x16x16xf32> to vector<1xf32>
    %113 = vector.shape_cast %112 : vector<1xf32> to vector<1x1x1xf32>
    %114 = vector.extract %113[0, 0, 0] : f32 from vector<1x1x1xf32>
    %cst_48 = arith.constant 1.000000e+00 : f32
    %115 = arith.addf %108, %cst_48 : f32
    %116 = arith.subf %114, %108 : f32
    %cst_49 = arith.constant 1.000000e+00 : f32
    %117 = arith.addf %116, %cst_49 : f32
    %118 = arith.divf %115, %117 : f32
    %cst_50 = arith.constant 1.000000e+00 : f32
    %119 = arith.subf %cst_50, %118 : f32
    %120 = vector.shape_cast %94 : vector<16x16xf32> to vector<1x16x16xf32>
    %cst_51 = arith.constant dense<0.000000e+00> : vector<1xf32>
    %121 = vector.multi_reduction <add>, %120, %cst_51 [1, 2] : vector<1x16x16xf32> to vector<1xf32>
    %122 = vector.shape_cast %121 : vector<1xf32> to vector<1x1x1xf32>
    %123 = vector.extract %122[0, 0, 0] : f32 from vector<1x1x1xf32>
    %124 = vector.broadcast %123 : f32 to vector<1x1xf32>
    %125 = arith.addf %66, %124 : vector<1x1xf32>
    %126 = vector.broadcast %119 : f32 to vector<1x1xf32>
    %127 = arith.addf %68, %126 : vector<1x1xf32>
    %c2 = arith.constant 2 : index
    %c0_52 = arith.constant 0 : index
    %c0_53 = arith.constant 0 : index
    %128 = vector.load %arg2[%c2, %c0_52, %c0_53] : memref<8x16x16xf32, #tpu.memory_space<vmem>>, vector<1x16x16xf32>
    %129 = vector.shape_cast %128 : vector<1x16x16xf32> to vector<16x16xf32>
    %c2_54 = arith.constant 2 : index
    %c0_55 = arith.constant 0 : index
    %c0_56 = arith.constant 0 : index
    %130 = vector.load %arg1[%c2_54, %c0_55, %c0_56] : memref<8x16x16xf32, #tpu.memory_space<vmem>>, vector<1x16x16xf32>
    %131 = vector.shape_cast %130 : vector<1x16x16xf32> to vector<16x16xf32>
    %132 = vector.extract_strided_slice %7 {offsets = [32, 0], sizes = [16, 16], strides = [1, 1]} : vector<128x16xf32> to vector<16x16xf32>
    %cst_57 = arith.constant dense<0.000000e+00> : vector<16x16xf32>
    %133 = tpu.matmul %3, %132, %cst_57 {dimension_numbers = #tpu.dot_dimension_numbers<[1], [0], [0], [1], [0, 0, 1, 1], [], []>} : vector<16x16xf32>, vector<16x16xf32>, vector<16x16xf32> -> vector<16x16xf32>
    %cst_58 = arith.constant 0.00104058278 : f32
    %134 = vector.broadcast %cst_58 : f32 to vector<16x16xf32>
    %135 = arith.mulf %133, %134 : vector<16x16xf32>
    %136 = arith.subf %135, %129 : vector<16x16xf32>
    %137 = math.absf %136 : vector<16x16xf32>
    %cst_59 = arith.constant 5.000000e+00 : f32
    %138 = vector.broadcast %cst_59 : f32 to vector<16x16xf32>
    %139 = arith.mulf %138, %137 : vector<16x16xf32>
    %cst_60 = arith.constant 1.000000e+00 : f32
    %140 = vector.broadcast %cst_60 : f32 to vector<16x16xf32>
    %141 = arith.addf %140, %139 : vector<16x16xf32>
    %142 = math.absf %131 : vector<16x16xf32>
    %cst_61 = arith.constant 0.000000e+00 : f32
    %143 = vector.broadcast %cst_61 : f32 to vector<16x16xf32>
    %144 = arith.subf %143, %142 : vector<16x16xf32>
    %145 = math.exp %144 : vector<16x16xf32>
    %cst_62 = arith.constant 0.000000e+00 : f32
    %146 = vector.broadcast %cst_62 : f32 to vector<16x16xf32>
    %147 = arith.maximumf %131, %146 : vector<16x16xf32>
    %148 = arith.mulf %131, %129 : vector<16x16xf32>
    %149 = arith.subf %147, %148 : vector<16x16xf32>
    %cst_63 = arith.constant 1.000000e+00 : f32
    %150 = vector.broadcast %cst_63 : f32 to vector<16x16xf32>
    %151 = arith.addf %150, %145 : vector<16x16xf32>
    %152 = math.log %151 : vector<16x16xf32>
    %153 = arith.addf %149, %152 : vector<16x16xf32>
    %cst_64 = arith.constant 1.000000e+00 : f32
    %154 = vector.broadcast %cst_64 : f32 to vector<16x16xf32>
    %155 = arith.addf %154, %145 : vector<16x16xf32>
    %cst_65 = arith.constant 1.000000e+00 : f32
    %156 = vector.broadcast %cst_65 : f32 to vector<16x16xf32>
    %157 = arith.divf %156, %155 : vector<16x16xf32>
    %cst_66 = arith.constant 0.000000e+00 : f32
    %158 = vector.broadcast %cst_66 : f32 to vector<16x16xf32>
    %159 = arith.cmpf oge, %131, %158 : vector<16x16xf32>
    %160 = arith.mulf %145, %157 : vector<16x16xf32>
    %161 = arith.select %159, %157, %160 : vector<16x16xi1>, vector<16x16xf32>
    %162 = arith.mulf %161, %129 : vector<16x16xf32>
    %163 = arith.mulf %162, %141 : vector<16x16xf32>
    %164 = vector.shape_cast %163 : vector<16x16xf32> to vector<1x16x16xf32>
    %cst_67 = arith.constant dense<0.000000e+00> : vector<1xf32>
    %165 = vector.multi_reduction <add>, %164, %cst_67 [1, 2] : vector<1x16x16xf32> to vector<1xf32>
    %166 = vector.shape_cast %165 : vector<1xf32> to vector<1x1x1xf32>
    %167 = vector.extract %166[0, 0, 0] : f32 from vector<1x1x1xf32>
    %168 = arith.addf %161, %129 : vector<16x16xf32>
    %169 = arith.mulf %168, %141 : vector<16x16xf32>
    %170 = vector.shape_cast %169 : vector<16x16xf32> to vector<1x16x16xf32>
    %cst_68 = arith.constant dense<0.000000e+00> : vector<1xf32>
    %171 = vector.multi_reduction <add>, %170, %cst_68 [1, 2] : vector<1x16x16xf32> to vector<1xf32>
    %172 = vector.shape_cast %171 : vector<1xf32> to vector<1x1x1xf32>
    %173 = vector.extract %172[0, 0, 0] : f32 from vector<1x1x1xf32>
    %cst_69 = arith.constant 1.000000e+00 : f32
    %174 = arith.addf %167, %cst_69 : f32
    %175 = arith.subf %173, %167 : f32
    %cst_70 = arith.constant 1.000000e+00 : f32
    %176 = arith.addf %175, %cst_70 : f32
    %177 = arith.divf %174, %176 : f32
    %cst_71 = arith.constant 1.000000e+00 : f32
    %178 = arith.subf %cst_71, %177 : f32
    %179 = vector.shape_cast %153 : vector<16x16xf32> to vector<1x16x16xf32>
    %cst_72 = arith.constant dense<0.000000e+00> : vector<1xf32>
    %180 = vector.multi_reduction <add>, %179, %cst_72 [1, 2] : vector<1x16x16xf32> to vector<1xf32>
    %181 = vector.shape_cast %180 : vector<1xf32> to vector<1x1x1xf32>
    %182 = vector.extract %181[0, 0, 0] : f32 from vector<1x1x1xf32>
    %183 = vector.broadcast %182 : f32 to vector<1x1xf32>
    %184 = arith.addf %125, %183 : vector<1x1xf32>
    %185 = vector.broadcast %178 : f32 to vector<1x1xf32>
    %186 = arith.addf %127, %185 : vector<1x1xf32>
    %c3 = arith.constant 3 : index
    %c0_73 = arith.constant 0 : index
    %c0_74 = arith.constant 0 : index
    %187 = vector.load %arg2[%c3, %c0_73, %c0_74] : memref<8x16x16xf32, #tpu.memory_space<vmem>>, vector<1x16x16xf32>
    %188 = vector.shape_cast %187 : vector<1x16x16xf32> to vector<16x16xf32>
    %c3_75 = arith.constant 3 : index
    %c0_76 = arith.constant 0 : index
    %c0_77 = arith.constant 0 : index
    %189 = vector.load %arg1[%c3_75, %c0_76, %c0_77] : memref<8x16x16xf32, #tpu.memory_space<vmem>>, vector<1x16x16xf32>
    %190 = vector.shape_cast %189 : vector<1x16x16xf32> to vector<16x16xf32>
    %191 = vector.extract_strided_slice %7 {offsets = [48, 0], sizes = [16, 16], strides = [1, 1]} : vector<128x16xf32> to vector<16x16xf32>
    %cst_78 = arith.constant dense<0.000000e+00> : vector<16x16xf32>
    %192 = tpu.matmul %3, %191, %cst_78 {dimension_numbers = #tpu.dot_dimension_numbers<[1], [0], [0], [1], [0, 0, 1, 1], [], []>} : vector<16x16xf32>, vector<16x16xf32>, vector<16x16xf32> -> vector<16x16xf32>
    %cst_79 = arith.constant 0.00104058278 : f32
    %193 = vector.broadcast %cst_79 : f32 to vector<16x16xf32>
    %194 = arith.mulf %192, %193 : vector<16x16xf32>
    %195 = arith.subf %194, %188 : vector<16x16xf32>
    %196 = math.absf %195 : vector<16x16xf32>
    %cst_80 = arith.constant 5.000000e+00 : f32
    %197 = vector.broadcast %cst_80 : f32 to vector<16x16xf32>
    %198 = arith.mulf %197, %196 : vector<16x16xf32>
    %cst_81 = arith.constant 1.000000e+00 : f32
    %199 = vector.broadcast %cst_81 : f32 to vector<16x16xf32>
    %200 = arith.addf %199, %198 : vector<16x16xf32>
    %201 = math.absf %190 : vector<16x16xf32>
    %cst_82 = arith.constant 0.000000e+00 : f32
    %202 = vector.broadcast %cst_82 : f32 to vector<16x16xf32>
    %203 = arith.subf %202, %201 : vector<16x16xf32>
    %204 = math.exp %203 : vector<16x16xf32>
    %cst_83 = arith.constant 0.000000e+00 : f32
    %205 = vector.broadcast %cst_83 : f32 to vector<16x16xf32>
    %206 = arith.maximumf %190, %205 : vector<16x16xf32>
    %207 = arith.mulf %190, %188 : vector<16x16xf32>
    %208 = arith.subf %206, %207 : vector<16x16xf32>
    %cst_84 = arith.constant 1.000000e+00 : f32
    %209 = vector.broadcast %cst_84 : f32 to vector<16x16xf32>
    %210 = arith.addf %209, %204 : vector<16x16xf32>
    %211 = math.log %210 : vector<16x16xf32>
    %212 = arith.addf %208, %211 : vector<16x16xf32>
    %cst_85 = arith.constant 1.000000e+00 : f32
    %213 = vector.broadcast %cst_85 : f32 to vector<16x16xf32>
    %214 = arith.addf %213, %204 : vector<16x16xf32>
    %cst_86 = arith.constant 1.000000e+00 : f32
    %215 = vector.broadcast %cst_86 : f32 to vector<16x16xf32>
    %216 = arith.divf %215, %214 : vector<16x16xf32>
    %cst_87 = arith.constant 0.000000e+00 : f32
    %217 = vector.broadcast %cst_87 : f32 to vector<16x16xf32>
    %218 = arith.cmpf oge, %190, %217 : vector<16x16xf32>
    %219 = arith.mulf %204, %216 : vector<16x16xf32>
    %220 = arith.select %218, %216, %219 : vector<16x16xi1>, vector<16x16xf32>
    %221 = arith.mulf %220, %188 : vector<16x16xf32>
    %222 = arith.mulf %221, %200 : vector<16x16xf32>
    %223 = vector.shape_cast %222 : vector<16x16xf32> to vector<1x16x16xf32>
    %cst_88 = arith.constant dense<0.000000e+00> : vector<1xf32>
    %224 = vector.multi_reduction <add>, %223, %cst_88 [1, 2] : vector<1x16x16xf32> to vector<1xf32>
    %225 = vector.shape_cast %224 : vector<1xf32> to vector<1x1x1xf32>
    %226 = vector.extract %225[0, 0, 0] : f32 from vector<1x1x1xf32>
    %227 = arith.addf %220, %188 : vector<16x16xf32>
    %228 = arith.mulf %227, %200 : vector<16x16xf32>
    %229 = vector.shape_cast %228 : vector<16x16xf32> to vector<1x16x16xf32>
    %cst_89 = arith.constant dense<0.000000e+00> : vector<1xf32>
    %230 = vector.multi_reduction <add>, %229, %cst_89 [1, 2] : vector<1x16x16xf32> to vector<1xf32>
    %231 = vector.shape_cast %230 : vector<1xf32> to vector<1x1x1xf32>
    %232 = vector.extract %231[0, 0, 0] : f32 from vector<1x1x1xf32>
    %cst_90 = arith.constant 1.000000e+00 : f32
    %233 = arith.addf %226, %cst_90 : f32
    %234 = arith.subf %232, %226 : f32
    %cst_91 = arith.constant 1.000000e+00 : f32
    %235 = arith.addf %234, %cst_91 : f32
    %236 = arith.divf %233, %235 : f32
    %cst_92 = arith.constant 1.000000e+00 : f32
    %237 = arith.subf %cst_92, %236 : f32
    %238 = vector.shape_cast %212 : vector<16x16xf32> to vector<1x16x16xf32>
    %cst_93 = arith.constant dense<0.000000e+00> : vector<1xf32>
    %239 = vector.multi_reduction <add>, %238, %cst_93 [1, 2] : vector<1x16x16xf32> to vector<1xf32>
    %240 = vector.shape_cast %239 : vector<1xf32> to vector<1x1x1xf32>
    %241 = vector.extract %240[0, 0, 0] : f32 from vector<1x1x1xf32>
    %242 = vector.broadcast %241 : f32 to vector<1x1xf32>
    %243 = arith.addf %184, %242 : vector<1x1xf32>
    %244 = vector.broadcast %237 : f32 to vector<1x1xf32>
    %245 = arith.addf %186, %244 : vector<1x1xf32>
    %c4 = arith.constant 4 : index
    %c0_94 = arith.constant 0 : index
    %c0_95 = arith.constant 0 : index
    %246 = vector.load %arg2[%c4, %c0_94, %c0_95] : memref<8x16x16xf32, #tpu.memory_space<vmem>>, vector<1x16x16xf32>
    %247 = vector.shape_cast %246 : vector<1x16x16xf32> to vector<16x16xf32>
    %c4_96 = arith.constant 4 : index
    %c0_97 = arith.constant 0 : index
    %c0_98 = arith.constant 0 : index
    %248 = vector.load %arg1[%c4_96, %c0_97, %c0_98] : memref<8x16x16xf32, #tpu.memory_space<vmem>>, vector<1x16x16xf32>
    %249 = vector.shape_cast %248 : vector<1x16x16xf32> to vector<16x16xf32>
    %250 = vector.extract_strided_slice %7 {offsets = [64, 0], sizes = [16, 16], strides = [1, 1]} : vector<128x16xf32> to vector<16x16xf32>
    %cst_99 = arith.constant dense<0.000000e+00> : vector<16x16xf32>
    %251 = tpu.matmul %3, %250, %cst_99 {dimension_numbers = #tpu.dot_dimension_numbers<[1], [0], [0], [1], [0, 0, 1, 1], [], []>} : vector<16x16xf32>, vector<16x16xf32>, vector<16x16xf32> -> vector<16x16xf32>
    %cst_100 = arith.constant 0.00104058278 : f32
    %252 = vector.broadcast %cst_100 : f32 to vector<16x16xf32>
    %253 = arith.mulf %251, %252 : vector<16x16xf32>
    %254 = arith.subf %253, %247 : vector<16x16xf32>
    %255 = math.absf %254 : vector<16x16xf32>
    %cst_101 = arith.constant 5.000000e+00 : f32
    %256 = vector.broadcast %cst_101 : f32 to vector<16x16xf32>
    %257 = arith.mulf %256, %255 : vector<16x16xf32>
    %cst_102 = arith.constant 1.000000e+00 : f32
    %258 = vector.broadcast %cst_102 : f32 to vector<16x16xf32>
    %259 = arith.addf %258, %257 : vector<16x16xf32>
    %260 = math.absf %249 : vector<16x16xf32>
    %cst_103 = arith.constant 0.000000e+00 : f32
    %261 = vector.broadcast %cst_103 : f32 to vector<16x16xf32>
    %262 = arith.subf %261, %260 : vector<16x16xf32>
    %263 = math.exp %262 : vector<16x16xf32>
    %cst_104 = arith.constant 0.000000e+00 : f32
    %264 = vector.broadcast %cst_104 : f32 to vector<16x16xf32>
    %265 = arith.maximumf %249, %264 : vector<16x16xf32>
    %266 = arith.mulf %249, %247 : vector<16x16xf32>
    %267 = arith.subf %265, %266 : vector<16x16xf32>
    %cst_105 = arith.constant 1.000000e+00 : f32
    %268 = vector.broadcast %cst_105 : f32 to vector<16x16xf32>
    %269 = arith.addf %268, %263 : vector<16x16xf32>
    %270 = math.log %269 : vector<16x16xf32>
    %271 = arith.addf %267, %270 : vector<16x16xf32>
    %cst_106 = arith.constant 1.000000e+00 : f32
    %272 = vector.broadcast %cst_106 : f32 to vector<16x16xf32>
    %273 = arith.addf %272, %263 : vector<16x16xf32>
    %cst_107 = arith.constant 1.000000e+00 : f32
    %274 = vector.broadcast %cst_107 : f32 to vector<16x16xf32>
    %275 = arith.divf %274, %273 : vector<16x16xf32>
    %cst_108 = arith.constant 0.000000e+00 : f32
    %276 = vector.broadcast %cst_108 : f32 to vector<16x16xf32>
    %277 = arith.cmpf oge, %249, %276 : vector<16x16xf32>
    %278 = arith.mulf %263, %275 : vector<16x16xf32>
    %279 = arith.select %277, %275, %278 : vector<16x16xi1>, vector<16x16xf32>
    %280 = arith.mulf %279, %247 : vector<16x16xf32>
    %281 = arith.mulf %280, %259 : vector<16x16xf32>
    %282 = vector.shape_cast %281 : vector<16x16xf32> to vector<1x16x16xf32>
    %cst_109 = arith.constant dense<0.000000e+00> : vector<1xf32>
    %283 = vector.multi_reduction <add>, %282, %cst_109 [1, 2] : vector<1x16x16xf32> to vector<1xf32>
    %284 = vector.shape_cast %283 : vector<1xf32> to vector<1x1x1xf32>
    %285 = vector.extract %284[0, 0, 0] : f32 from vector<1x1x1xf32>
    %286 = arith.addf %279, %247 : vector<16x16xf32>
    %287 = arith.mulf %286, %259 : vector<16x16xf32>
    %288 = vector.shape_cast %287 : vector<16x16xf32> to vector<1x16x16xf32>
    %cst_110 = arith.constant dense<0.000000e+00> : vector<1xf32>
    %289 = vector.multi_reduction <add>, %288, %cst_110 [1, 2] : vector<1x16x16xf32> to vector<1xf32>
    %290 = vector.shape_cast %289 : vector<1xf32> to vector<1x1x1xf32>
    %291 = vector.extract %290[0, 0, 0] : f32 from vector<1x1x1xf32>
    %cst_111 = arith.constant 1.000000e+00 : f32
    %292 = arith.addf %285, %cst_111 : f32
    %293 = arith.subf %291, %285 : f32
    %cst_112 = arith.constant 1.000000e+00 : f32
    %294 = arith.addf %293, %cst_112 : f32
    %295 = arith.divf %292, %294 : f32
    %cst_113 = arith.constant 1.000000e+00 : f32
    %296 = arith.subf %cst_113, %295 : f32
    %297 = vector.shape_cast %271 : vector<16x16xf32> to vector<1x16x16xf32>
    %cst_114 = arith.constant dense<0.000000e+00> : vector<1xf32>
    %298 = vector.multi_reduction <add>, %297, %cst_114 [1, 2] : vector<1x16x16xf32> to vector<1xf32>
    %299 = vector.shape_cast %298 : vector<1xf32> to vector<1x1x1xf32>
    %300 = vector.extract %299[0, 0, 0] : f32 from vector<1x1x1xf32>
    %301 = vector.broadcast %300 : f32 to vector<1x1xf32>
    %302 = arith.addf %243, %301 : vector<1x1xf32>
    %303 = vector.broadcast %296 : f32 to vector<1x1xf32>
    %304 = arith.addf %245, %303 : vector<1x1xf32>
    %c5 = arith.constant 5 : index
    %c0_115 = arith.constant 0 : index
    %c0_116 = arith.constant 0 : index
    %305 = vector.load %arg2[%c5, %c0_115, %c0_116] : memref<8x16x16xf32, #tpu.memory_space<vmem>>, vector<1x16x16xf32>
    %306 = vector.shape_cast %305 : vector<1x16x16xf32> to vector<16x16xf32>
    %c5_117 = arith.constant 5 : index
    %c0_118 = arith.constant 0 : index
    %c0_119 = arith.constant 0 : index
    %307 = vector.load %arg1[%c5_117, %c0_118, %c0_119] : memref<8x16x16xf32, #tpu.memory_space<vmem>>, vector<1x16x16xf32>
    %308 = vector.shape_cast %307 : vector<1x16x16xf32> to vector<16x16xf32>
    %309 = vector.extract_strided_slice %7 {offsets = [80, 0], sizes = [16, 16], strides = [1, 1]} : vector<128x16xf32> to vector<16x16xf32>
    %cst_120 = arith.constant dense<0.000000e+00> : vector<16x16xf32>
    %310 = tpu.matmul %3, %309, %cst_120 {dimension_numbers = #tpu.dot_dimension_numbers<[1], [0], [0], [1], [0, 0, 1, 1], [], []>} : vector<16x16xf32>, vector<16x16xf32>, vector<16x16xf32> -> vector<16x16xf32>
    %cst_121 = arith.constant 0.00104058278 : f32
    %311 = vector.broadcast %cst_121 : f32 to vector<16x16xf32>
    %312 = arith.mulf %310, %311 : vector<16x16xf32>
    %313 = arith.subf %312, %306 : vector<16x16xf32>
    %314 = math.absf %313 : vector<16x16xf32>
    %cst_122 = arith.constant 5.000000e+00 : f32
    %315 = vector.broadcast %cst_122 : f32 to vector<16x16xf32>
    %316 = arith.mulf %315, %314 : vector<16x16xf32>
    %cst_123 = arith.constant 1.000000e+00 : f32
    %317 = vector.broadcast %cst_123 : f32 to vector<16x16xf32>
    %318 = arith.addf %317, %316 : vector<16x16xf32>
    %319 = math.absf %308 : vector<16x16xf32>
    %cst_124 = arith.constant 0.000000e+00 : f32
    %320 = vector.broadcast %cst_124 : f32 to vector<16x16xf32>
    %321 = arith.subf %320, %319 : vector<16x16xf32>
    %322 = math.exp %321 : vector<16x16xf32>
    %cst_125 = arith.constant 0.000000e+00 : f32
    %323 = vector.broadcast %cst_125 : f32 to vector<16x16xf32>
    %324 = arith.maximumf %308, %323 : vector<16x16xf32>
    %325 = arith.mulf %308, %306 : vector<16x16xf32>
    %326 = arith.subf %324, %325 : vector<16x16xf32>
    %cst_126 = arith.constant 1.000000e+00 : f32
    %327 = vector.broadcast %cst_126 : f32 to vector<16x16xf32>
    %328 = arith.addf %327, %322 : vector<16x16xf32>
    %329 = math.log %328 : vector<16x16xf32>
    %330 = arith.addf %326, %329 : vector<16x16xf32>
    %cst_127 = arith.constant 1.000000e+00 : f32
    %331 = vector.broadcast %cst_127 : f32 to vector<16x16xf32>
    %332 = arith.addf %331, %322 : vector<16x16xf32>
    %cst_128 = arith.constant 1.000000e+00 : f32
    %333 = vector.broadcast %cst_128 : f32 to vector<16x16xf32>
    %334 = arith.divf %333, %332 : vector<16x16xf32>
    %cst_129 = arith.constant 0.000000e+00 : f32
    %335 = vector.broadcast %cst_129 : f32 to vector<16x16xf32>
    %336 = arith.cmpf oge, %308, %335 : vector<16x16xf32>
    %337 = arith.mulf %322, %334 : vector<16x16xf32>
    %338 = arith.select %336, %334, %337 : vector<16x16xi1>, vector<16x16xf32>
    %339 = arith.mulf %338, %306 : vector<16x16xf32>
    %340 = arith.mulf %339, %318 : vector<16x16xf32>
    %341 = vector.shape_cast %340 : vector<16x16xf32> to vector<1x16x16xf32>
    %cst_130 = arith.constant dense<0.000000e+00> : vector<1xf32>
    %342 = vector.multi_reduction <add>, %341, %cst_130 [1, 2] : vector<1x16x16xf32> to vector<1xf32>
    %343 = vector.shape_cast %342 : vector<1xf32> to vector<1x1x1xf32>
    %344 = vector.extract %343[0, 0, 0] : f32 from vector<1x1x1xf32>
    %345 = arith.addf %338, %306 : vector<16x16xf32>
    %346 = arith.mulf %345, %318 : vector<16x16xf32>
    %347 = vector.shape_cast %346 : vector<16x16xf32> to vector<1x16x16xf32>
    %cst_131 = arith.constant dense<0.000000e+00> : vector<1xf32>
    %348 = vector.multi_reduction <add>, %347, %cst_131 [1, 2] : vector<1x16x16xf32> to vector<1xf32>
    %349 = vector.shape_cast %348 : vector<1xf32> to vector<1x1x1xf32>
    %350 = vector.extract %349[0, 0, 0] : f32 from vector<1x1x1xf32>
    %cst_132 = arith.constant 1.000000e+00 : f32
    %351 = arith.addf %344, %cst_132 : f32
    %352 = arith.subf %350, %344 : f32
    %cst_133 = arith.constant 1.000000e+00 : f32
    %353 = arith.addf %352, %cst_133 : f32
    %354 = arith.divf %351, %353 : f32
    %cst_134 = arith.constant 1.000000e+00 : f32
    %355 = arith.subf %cst_134, %354 : f32
    %356 = vector.shape_cast %330 : vector<16x16xf32> to vector<1x16x16xf32>
    %cst_135 = arith.constant dense<0.000000e+00> : vector<1xf32>
    %357 = vector.multi_reduction <add>, %356, %cst_135 [1, 2] : vector<1x16x16xf32> to vector<1xf32>
    %358 = vector.shape_cast %357 : vector<1xf32> to vector<1x1x1xf32>
    %359 = vector.extract %358[0, 0, 0] : f32 from vector<1x1x1xf32>
    %360 = vector.broadcast %359 : f32 to vector<1x1xf32>
    %361 = arith.addf %302, %360 : vector<1x1xf32>
    %362 = vector.broadcast %355 : f32 to vector<1x1xf32>
    %363 = arith.addf %304, %362 : vector<1x1xf32>
    %c6 = arith.constant 6 : index
    %c0_136 = arith.constant 0 : index
    %c0_137 = arith.constant 0 : index
    %364 = vector.load %arg2[%c6, %c0_136, %c0_137] : memref<8x16x16xf32, #tpu.memory_space<vmem>>, vector<1x16x16xf32>
    %365 = vector.shape_cast %364 : vector<1x16x16xf32> to vector<16x16xf32>
    %c6_138 = arith.constant 6 : index
    %c0_139 = arith.constant 0 : index
    %c0_140 = arith.constant 0 : index
    %366 = vector.load %arg1[%c6_138, %c0_139, %c0_140] : memref<8x16x16xf32, #tpu.memory_space<vmem>>, vector<1x16x16xf32>
    %367 = vector.shape_cast %366 : vector<1x16x16xf32> to vector<16x16xf32>
    %368 = vector.extract_strided_slice %7 {offsets = [96, 0], sizes = [16, 16], strides = [1, 1]} : vector<128x16xf32> to vector<16x16xf32>
    %cst_141 = arith.constant dense<0.000000e+00> : vector<16x16xf32>
    %369 = tpu.matmul %3, %368, %cst_141 {dimension_numbers = #tpu.dot_dimension_numbers<[1], [0], [0], [1], [0, 0, 1, 1], [], []>} : vector<16x16xf32>, vector<16x16xf32>, vector<16x16xf32> -> vector<16x16xf32>
    %cst_142 = arith.constant 0.00104058278 : f32
    %370 = vector.broadcast %cst_142 : f32 to vector<16x16xf32>
    %371 = arith.mulf %369, %370 : vector<16x16xf32>
    %372 = arith.subf %371, %365 : vector<16x16xf32>
    %373 = math.absf %372 : vector<16x16xf32>
    %cst_143 = arith.constant 5.000000e+00 : f32
    %374 = vector.broadcast %cst_143 : f32 to vector<16x16xf32>
    %375 = arith.mulf %374, %373 : vector<16x16xf32>
    %cst_144 = arith.constant 1.000000e+00 : f32
    %376 = vector.broadcast %cst_144 : f32 to vector<16x16xf32>
    %377 = arith.addf %376, %375 : vector<16x16xf32>
    %378 = math.absf %367 : vector<16x16xf32>
    %cst_145 = arith.constant 0.000000e+00 : f32
    %379 = vector.broadcast %cst_145 : f32 to vector<16x16xf32>
    %380 = arith.subf %379, %378 : vector<16x16xf32>
    %381 = math.exp %380 : vector<16x16xf32>
    %cst_146 = arith.constant 0.000000e+00 : f32
    %382 = vector.broadcast %cst_146 : f32 to vector<16x16xf32>
    %383 = arith.maximumf %367, %382 : vector<16x16xf32>
    %384 = arith.mulf %367, %365 : vector<16x16xf32>
    %385 = arith.subf %383, %384 : vector<16x16xf32>
    %cst_147 = arith.constant 1.000000e+00 : f32
    %386 = vector.broadcast %cst_147 : f32 to vector<16x16xf32>
    %387 = arith.addf %386, %381 : vector<16x16xf32>
    %388 = math.log %387 : vector<16x16xf32>
    %389 = arith.addf %385, %388 : vector<16x16xf32>
    %cst_148 = arith.constant 1.000000e+00 : f32
    %390 = vector.broadcast %cst_148 : f32 to vector<16x16xf32>
    %391 = arith.addf %390, %381 : vector<16x16xf32>
    %cst_149 = arith.constant 1.000000e+00 : f32
    %392 = vector.broadcast %cst_149 : f32 to vector<16x16xf32>
    %393 = arith.divf %392, %391 : vector<16x16xf32>
    %cst_150 = arith.constant 0.000000e+00 : f32
    %394 = vector.broadcast %cst_150 : f32 to vector<16x16xf32>
    %395 = arith.cmpf oge, %367, %394 : vector<16x16xf32>
    %396 = arith.mulf %381, %393 : vector<16x16xf32>
    %397 = arith.select %395, %393, %396 : vector<16x16xi1>, vector<16x16xf32>
    %398 = arith.mulf %397, %365 : vector<16x16xf32>
    %399 = arith.mulf %398, %377 : vector<16x16xf32>
    %400 = vector.shape_cast %399 : vector<16x16xf32> to vector<1x16x16xf32>
    %cst_151 = arith.constant dense<0.000000e+00> : vector<1xf32>
    %401 = vector.multi_reduction <add>, %400, %cst_151 [1, 2] : vector<1x16x16xf32> to vector<1xf32>
    %402 = vector.shape_cast %401 : vector<1xf32> to vector<1x1x1xf32>
    %403 = vector.extract %402[0, 0, 0] : f32 from vector<1x1x1xf32>
    %404 = arith.addf %397, %365 : vector<16x16xf32>
    %405 = arith.mulf %404, %377 : vector<16x16xf32>
    %406 = vector.shape_cast %405 : vector<16x16xf32> to vector<1x16x16xf32>
    %cst_152 = arith.constant dense<0.000000e+00> : vector<1xf32>
    %407 = vector.multi_reduction <add>, %406, %cst_152 [1, 2] : vector<1x16x16xf32> to vector<1xf32>
    %408 = vector.shape_cast %407 : vector<1xf32> to vector<1x1x1xf32>
    %409 = vector.extract %408[0, 0, 0] : f32 from vector<1x1x1xf32>
    %cst_153 = arith.constant 1.000000e+00 : f32
    %410 = arith.addf %403, %cst_153 : f32
    %411 = arith.subf %409, %403 : f32
    %cst_154 = arith.constant 1.000000e+00 : f32
    %412 = arith.addf %411, %cst_154 : f32
    %413 = arith.divf %410, %412 : f32
    %cst_155 = arith.constant 1.000000e+00 : f32
    %414 = arith.subf %cst_155, %413 : f32
    %415 = vector.shape_cast %389 : vector<16x16xf32> to vector<1x16x16xf32>
    %cst_156 = arith.constant dense<0.000000e+00> : vector<1xf32>
    %416 = vector.multi_reduction <add>, %415, %cst_156 [1, 2] : vector<1x16x16xf32> to vector<1xf32>
    %417 = vector.shape_cast %416 : vector<1xf32> to vector<1x1x1xf32>
    %418 = vector.extract %417[0, 0, 0] : f32 from vector<1x1x1xf32>
    %419 = vector.broadcast %418 : f32 to vector<1x1xf32>
    %420 = arith.addf %361, %419 : vector<1x1xf32>
    %421 = vector.broadcast %414 : f32 to vector<1x1xf32>
    %422 = arith.addf %363, %421 : vector<1x1xf32>
    %c7 = arith.constant 7 : index
    %c0_157 = arith.constant 0 : index
    %c0_158 = arith.constant 0 : index
    %423 = vector.load %arg2[%c7, %c0_157, %c0_158] : memref<8x16x16xf32, #tpu.memory_space<vmem>>, vector<1x16x16xf32>
    %424 = vector.shape_cast %423 : vector<1x16x16xf32> to vector<16x16xf32>
    %c7_159 = arith.constant 7 : index
    %c0_160 = arith.constant 0 : index
    %c0_161 = arith.constant 0 : index
    %425 = vector.load %arg1[%c7_159, %c0_160, %c0_161] : memref<8x16x16xf32, #tpu.memory_space<vmem>>, vector<1x16x16xf32>
    %426 = vector.shape_cast %425 : vector<1x16x16xf32> to vector<16x16xf32>
    %427 = vector.extract_strided_slice %7 {offsets = [112, 0], sizes = [16, 16], strides = [1, 1]} : vector<128x16xf32> to vector<16x16xf32>
    %cst_162 = arith.constant dense<0.000000e+00> : vector<16x16xf32>
    %428 = tpu.matmul %3, %427, %cst_162 {dimension_numbers = #tpu.dot_dimension_numbers<[1], [0], [0], [1], [0, 0, 1, 1], [], []>} : vector<16x16xf32>, vector<16x16xf32>, vector<16x16xf32> -> vector<16x16xf32>
    %cst_163 = arith.constant 0.00104058278 : f32
    %429 = vector.broadcast %cst_163 : f32 to vector<16x16xf32>
    %430 = arith.mulf %428, %429 : vector<16x16xf32>
    %431 = arith.subf %430, %424 : vector<16x16xf32>
    %432 = math.absf %431 : vector<16x16xf32>
    %cst_164 = arith.constant 5.000000e+00 : f32
    %433 = vector.broadcast %cst_164 : f32 to vector<16x16xf32>
    %434 = arith.mulf %433, %432 : vector<16x16xf32>
    %cst_165 = arith.constant 1.000000e+00 : f32
    %435 = vector.broadcast %cst_165 : f32 to vector<16x16xf32>
    %436 = arith.addf %435, %434 : vector<16x16xf32>
    %437 = math.absf %426 : vector<16x16xf32>
    %cst_166 = arith.constant 0.000000e+00 : f32
    %438 = vector.broadcast %cst_166 : f32 to vector<16x16xf32>
    %439 = arith.subf %438, %437 : vector<16x16xf32>
    %440 = math.exp %439 : vector<16x16xf32>
    %cst_167 = arith.constant 0.000000e+00 : f32
    %441 = vector.broadcast %cst_167 : f32 to vector<16x16xf32>
    %442 = arith.maximumf %426, %441 : vector<16x16xf32>
    %443 = arith.mulf %426, %424 : vector<16x16xf32>
    %444 = arith.subf %442, %443 : vector<16x16xf32>
    %cst_168 = arith.constant 1.000000e+00 : f32
    %445 = vector.broadcast %cst_168 : f32 to vector<16x16xf32>
    %446 = arith.addf %445, %440 : vector<16x16xf32>
    %447 = math.log %446 : vector<16x16xf32>
    %448 = arith.addf %444, %447 : vector<16x16xf32>
    %cst_169 = arith.constant 1.000000e+00 : f32
    %449 = vector.broadcast %cst_169 : f32 to vector<16x16xf32>
    %450 = arith.addf %449, %440 : vector<16x16xf32>
    %cst_170 = arith.constant 1.000000e+00 : f32
    %451 = vector.broadcast %cst_170 : f32 to vector<16x16xf32>
    %452 = arith.divf %451, %450 : vector<16x16xf32>
    %cst_171 = arith.constant 0.000000e+00 : f32
    %453 = vector.broadcast %cst_171 : f32 to vector<16x16xf32>
    %454 = arith.cmpf oge, %426, %453 : vector<16x16xf32>
    %455 = arith.mulf %440, %452 : vector<16x16xf32>
    %456 = arith.select %454, %452, %455 : vector<16x16xi1>, vector<16x16xf32>
    %457 = arith.mulf %456, %424 : vector<16x16xf32>
    %458 = arith.mulf %457, %436 : vector<16x16xf32>
    %459 = vector.shape_cast %458 : vector<16x16xf32> to vector<1x16x16xf32>
    %cst_172 = arith.constant dense<0.000000e+00> : vector<1xf32>
    %460 = vector.multi_reduction <add>, %459, %cst_172 [1, 2] : vector<1x16x16xf32> to vector<1xf32>
    %461 = vector.shape_cast %460 : vector<1xf32> to vector<1x1x1xf32>
    %462 = vector.extract %461[0, 0, 0] : f32 from vector<1x1x1xf32>
    %463 = arith.addf %456, %424 : vector<16x16xf32>
    %464 = arith.mulf %463, %436 : vector<16x16xf32>
    %465 = vector.shape_cast %464 : vector<16x16xf32> to vector<1x16x16xf32>
    %cst_173 = arith.constant dense<0.000000e+00> : vector<1xf32>
    %466 = vector.multi_reduction <add>, %465, %cst_173 [1, 2] : vector<1x16x16xf32> to vector<1xf32>
    %467 = vector.shape_cast %466 : vector<1xf32> to vector<1x1x1xf32>
    %468 = vector.extract %467[0, 0, 0] : f32 from vector<1x1x1xf32>
    %cst_174 = arith.constant 1.000000e+00 : f32
    %469 = arith.addf %462, %cst_174 : f32
    %470 = arith.subf %468, %462 : f32
    %cst_175 = arith.constant 1.000000e+00 : f32
    %471 = arith.addf %470, %cst_175 : f32
    %472 = arith.divf %469, %471 : f32
    %cst_176 = arith.constant 1.000000e+00 : f32
    %473 = arith.subf %cst_176, %472 : f32
    %474 = vector.shape_cast %448 : vector<16x16xf32> to vector<1x16x16xf32>
    %cst_177 = arith.constant dense<0.000000e+00> : vector<1xf32>
    %475 = vector.multi_reduction <add>, %474, %cst_177 [1, 2] : vector<1x16x16xf32> to vector<1xf32>
    %476 = vector.shape_cast %475 : vector<1xf32> to vector<1x1x1xf32>
    %477 = vector.extract %476[0, 0, 0] : f32 from vector<1x1x1xf32>
    %478 = vector.broadcast %477 : f32 to vector<1x1xf32>
    %479 = arith.addf %420, %478 : vector<1x1xf32>
    %480 = vector.broadcast %473 : f32 to vector<1x1xf32>
    %481 = arith.addf %422, %480 : vector<1x1xf32>
    %c0_178 = arith.constant 0 : index
    %c0_179 = arith.constant 0 : index
    %482 = vector.load %arg6[%c0_178, %c0_179] : memref<1x1xf32, #tpu.memory_space<vmem>>, vector<1x1xf32>
    %483 = arith.addf %482, %479 : vector<1x1xf32>
    %c0_180 = arith.constant 0 : index
    %c0_181 = arith.constant 0 : index
    %484 = vector.load %arg6[%c0_180, %c0_181] : memref<1x1xf32, #tpu.memory_space<vmem>>, vector<1x1xf32>
    tpu.vector_store %arg6[%c0_180, %c0_181], %483 {strides = array<i32>} : memref<1x1xf32, #tpu.memory_space<vmem>>, vector<1x1xf32>,
    %c0_182 = arith.constant 0 : index
    %c0_183 = arith.constant 0 : index
    %485 = vector.load %arg7[%c0_182, %c0_183] : memref<1x1xf32, #tpu.memory_space<vmem>>, vector<1x1xf32>
    %486 = arith.addf %485, %481 : vector<1x1xf32>
    %c0_184 = arith.constant 0 : index
    %c0_185 = arith.constant 0 : index
    %487 = vector.load %arg7[%c0_184, %c0_185] : memref<1x1xf32, #tpu.memory_space<vmem>>, vector<1x1xf32>
    tpu.vector_store %arg7[%c0_184, %c0_185], %486 {strides = array<i32>} : memref<1x1xf32, #tpu.memory_space<vmem>>, vector<1x1xf32>,
    %c0_186 = arith.constant 0 : index
    %c0_187 = arith.constant 0 : index
    %488 = vector.load %arg6[%c0_186, %c0_187] : memref<1x1xf32, #tpu.memory_space<vmem>>, vector<1x1xf32>
    %cst_188 = arith.constant 4.8828125E-4 : f32
    %489 = vector.broadcast %cst_188 : f32 to vector<1x1xf32>
    %490 = arith.mulf %488, %489 : vector<1x1xf32>
    %c0_189 = arith.constant 0 : index
    %c0_190 = arith.constant 0 : index
    %491 = vector.load %arg7[%c0_189, %c0_190] : memref<1x1xf32, #tpu.memory_space<vmem>>, vector<1x1xf32>
    %cst_191 = arith.constant 1.250000e-01 : f32
    %492 = vector.broadcast %cst_191 : f32 to vector<1x1xf32>
    %493 = arith.mulf %491, %492 : vector<1x1xf32>
    %494 = arith.addf %490, %493 : vector<1x1xf32>
    %c0_192 = arith.constant 0 : index
    %c0_193 = arith.constant 0 : index
    %495 = vector.load %arg5[%c0_192, %c0_193] : memref<1x1xf32, #tpu.memory_space<vmem>>, vector<1x1xf32>
    tpu.vector_store %arg5[%c0_192, %c0_193], %494 {strides = array<i32>} : memref<1x1xf32, #tpu.memory_space<vmem>>, vector<1x1xf32>,
    return
  }
  func.func @transform_0(%arg0: i32) -> (i32, i32, i32) {
    %c0_i32 = arith.constant 0 : i32
    %c0_i32_0 = arith.constant 0 : i32
    %c0_i32_1 = arith.constant 0 : i32
    return %arg0, %c0_i32, %c0_i32_0 : i32, i32, i32
  }
  func.func @transform_1(%arg0: i32) -> (i32, i32, i32) {
    %c0_i32 = arith.constant 0 : i32
    %c0_i32_0 = arith.constant 0 : i32
    %c0_i32_1 = arith.constant 0 : i32
    return %arg0, %c0_i32, %c0_i32_0 : i32, i32, i32
  }
  func.func @transform_2(%arg0: i32) -> (i32, i32) {
    %c0_i32 = arith.constant 0 : i32
    %c0_i32_0 = arith.constant 0 : i32
    %c0_i32_1 = arith.constant 0 : i32
    return %c0_i32, %c0_i32_0 : i32, i32
  }
  func.func @transform_3(%arg0: i32) -> (i32, i32) {
    %c0_i32 = arith.constant 0 : i32
    %c0_i32_0 = arith.constant 0 : i32
    %c0_i32_1 = arith.constant 0 : i32
    return %c0_i32, %c0_i32_0 : i32, i32
  }
  func.func @transform_4(%arg0: i32) -> (i32, i32) {
    %c0_i32 = arith.constant 0 : i32
    %c0_i32_0 = arith.constant 0 : i32
    %c0_i32_1 = arith.constant 0 : i32
    return %c0_i32, %c0_i32_0 : i32, i32
  }
}

</mosaic_0001>

<llo_original>
// kernel: tpu_custom_call.1
$region0: #{tpu_custom_call.1}
  #allocation0 [shape = 'u32[]', space=smem, size = 0x4, offset = 0x4, fixed_abs, tag = 'smem constant byte address 0x4 - core index']
  #allocation1 [shape = 'u32[144,128]{1,0:T(1,128)}', space=vmem, size = 0x12000, scoped, tag = 'internal scratch']
  #allocation2 [shape = 'f32[1,1]{1,0:T(1,128)}', space=vmem, size = 0x200, scoped, tag = 'scratch operand']
  #allocation3 [shape = 'f32[1,1]{1,0:T(1,128)}', space=vmem, size = 0x200, scoped, tag = 'scratch operand']
  %s0 = inlined_call_operand.hbm [shape: f32[8,16,16], index: 0, kind: input, shape index: {}]
  %s1 = inlined_call_operand.hbm [shape: f32[8,16,16], index: 1, kind: input, shape index: {}]
  %s2 = inlined_call_operand.hbm [shape: f32[16,16], index: 2, kind: input, shape index: {}]
  %s3 = inlined_call_operand.hbm [shape: f32[16,16], index: 3, kind: input, shape index: {}]
  %s4 = inlined_call_operand.hbm [shape: f32[1,1], index: 4, kind: output, shape index: {}]
  %s5 = sld [smem:[#allocation0]]
  $region46: #{tpu_custom_call.1} parent=0
    _
  %s7 = ssub.s32 1, %s5
  %s8 = scalar_select 0, %s7, %s5
  $region1: #{tpu_custom_call.1} parent=0
    #allocation4 [shape = 'u8[65536]{0}', space=vmem, size = 0x10000, scoped, tag = 'input window, operand 0, single buffered']
    #allocation5 [shape = 's32[1]{0}', space=sflag, size = 0x4, scoped, tag = 'scoped memory for tpu_custom_call.1']
    #allocation6 [shape = 's32[1]{0}', space=sflag, size = 0x4, scoped, tag = 'scoped memory for tpu_custom_call.1']
    #allocation7 [shape = 'u8[65536]{0}', space=vmem, size = 0x10000, scoped, tag = 'input window, operand 1, single buffered']
    #allocation8 [shape = 's32[1]{0}', space=sflag, size = 0x4, scoped, tag = 'scoped memory for tpu_custom_call.1']
    #allocation9 [shape = 'u8[8192]{0}', space=vmem, size = 0x2000, scoped, tag = 'input window, operand 2, single buffered']
    #allocation10 [shape = 'u8[8192]{0}', space=vmem, size = 0x2000, scoped, tag = 'input window, operand 3, single buffered']
    #allocation11 [shape = 's32[1]{0}', space=sflag, size = 0x4, scoped, tag = 'scoped memory for tpu_custom_call.1']
    #allocation12 [shape = 'u8[512]{0}', space=vmem, size = 0x400, scoped, tag = 'output window, operand 0, single buffered']
    %9 = vsyncpa [#allocation5], 0
    %10 = vsyncpa [#allocation8], 0
    %11 = vsyncpa [#allocation11], 0
    %12 = vsyncpa [#allocation6], 0
    // Predicated region
    $region2: #{tpu_custom_call.1} parent=1 // pred_check
      _
    $region3: #{tpu_custom_call.1} parent=1 // pred_check_branch
      %14 = sbr.rel (0) target = $region5
    $region4: #{tpu_custom_call.1} parent=1 // pred_region
      %s16 = ssub.s32 2048, 2048
      %17 = vsyncadd [#allocation5], %s16
      %s18 = sshll.u32 [#allocation4], 4
      %s19 = int_to_ptr.vmem [resolvable:$true] %s18
      %24 = dma.hbm_to_vmem [thread:$0]  %s0, 2048, %s19, [#allocation5], 128, 128, 8
    $region5: #{tpu_custom_call.1} parent=1 // pred_fallthru
      _
    // Predicated region
    $region6: #{tpu_custom_call.1} parent=1 // pred_check
      _
    $region7: #{tpu_custom_call.1} parent=1 // pred_check_branch
      %26 = sbr.rel (0) target = $region9
    $region8: #{tpu_custom_call.1} parent=1 // pred_region
      %s28 = ssub.s32 2048, 2048
      %29 = vsyncadd [#allocation8], %s28
      %s30 = sshll.u32 [#allocation7], 4
      %s31 = int_to_ptr.vmem [resolvable:$true] %s30
      %36 = dma.hbm_to_vmem [thread:$0]  %s1, 2048, %s31, [#allocation8], 128, 128, 8
    $region9: #{tpu_custom_call.1} parent=1 // pred_fallthru
      _
    // Predicated region
    $region10: #{tpu_custom_call.1} parent=1 // pred_check
      _
    $region11: #{tpu_custom_call.1} parent=1 // pred_check_branch
      %38 = sbr.rel (0) target = $region13
    $region12: #{tpu_custom_call.1} parent=1 // pred_region
      %s40 = ssub.s32 256, 256
      %41 = vsyncadd [#allocation8], %s40
      %s42 = sshll.u32 [#allocation9], 4
      %s43 = int_to_ptr.vmem [resolvable:$true] %s42
      %48 = dma.hbm_to_vmem [thread:$0]  %s2, 256, %s43, [#allocation8], 128, 128, 8
    $region13: #{tpu_custom_call.1} parent=1 // pred_fallthru
      _
    // Predicated region
    $region14: #{tpu_custom_call.1} parent=1 // pred_check
      _
    $region15: #{tpu_custom_call.1} parent=1 // pred_check_branch
      %50 = sbr.rel (0) target = $region17
    $region16: #{tpu_custom_call.1} parent=1 // pred_region
      %s52 = ssub.s32 256, 256
      %53 = vsyncadd [#allocation11], %s52
      %s54 = sshll.u32 [#allocation10], 4
      %s55 = int_to_ptr.vmem [resolvable:$true] %s54
      %60 = dma.hbm_to_vmem [thread:$0]  %s3, 256, %s55, [#allocation11], 128, 128, 8
    $region17: #{tpu_custom_call.1} parent=1 // pred_fallthru
      _
    // Predicated region
    $region18: #{tpu_custom_call.1} parent=1 // pred_check
      _
    $region19: #{tpu_custom_call.1} parent=1 // pred_check_branch
      %62 = sbr.rel (0) target = $region21
    $region20: #{tpu_custom_call.1} parent=1 // pred_region
      %63 = dma.done [#allocation5], 2048
    $region21: #{tpu_custom_call.1} parent=1 // pred_fallthru
      _
    // Predicated region
    $region22: #{tpu_custom_call.1} parent=1 // pred_check
      _
    $region23: #{tpu_custom_call.1} parent=1 // pred_check_branch
      %65 = sbr.rel (0) target = $region25
    $region24: #{tpu_custom_call.1} parent=1 // pred_region
      %66 = dma.done [#allocation8], 2048
    $region25: #{tpu_custom_call.1} parent=1 // pred_fallthru
      _
    // Predicated region
    $region26: #{tpu_custom_call.1} parent=1 // pred_check
      _
    $region27: #{tpu_custom_call.1} parent=1 // pred_check_branch
      %68 = sbr.rel (0) target = $region29
    $region28: #{tpu_custom_call.1} parent=1 // pred_region
      %69 = dma.done [#allocation8], 256
    $region29: #{tpu_custom_call.1} parent=1 // pred_fallthru
      _
    // Predicated region
    $region30: #{tpu_custom_call.1} parent=1 // pred_check
      _
    $region31: #{tpu_custom_call.1} parent=1 // pred_check_branch
      %71 = sbr.rel (0) target = $region33
    $region32: #{tpu_custom_call.1} parent=1 // pred_region
      %72 = dma.done [#allocation11], 256
    $region33: #{tpu_custom_call.1} parent=1 // pred_fallthru
      _
    %p73 = scmp.eq.s32.totalorder 0, 0
    // Predicated region
    $region34: #{tpu_custom_call.1} parent=1 // pred_check
      %p74 = pneg %p73
    $region35: #{tpu_custom_call.1} parent=1 // pred_check_branch
      %76 = sbr.rel (%p74) target = $region37
    $region36: #{tpu_custom_call.1} parent=1 // pred_region
      %vm77 = vcmask 0
      %78 = vst.msk [vmem:[#allocation2] sm:$0x1] %vm77, 0.0
      %79 = vst.msk [vmem:[#allocation3] sm:$0x1] %vm77, 0.0
    $region37: #{tpu_custom_call.1} parent=1 // pred_fallthru
      _
    %v80 = vld [vmem:[#allocation9] sm:$0xff]
    %v81 = vld [vmem:[#allocation9 + $0x8] sm:$0xff]
    %v82 = vld [vmem:[#allocation10] sm:$0xff]
    %v83 = vld [vmem:[#allocation10 + $0x8] sm:$0xff]
    %v84 = vld [vmem:[#allocation7] sm:$0xff]
    %v85 = vld [vmem:[#allocation7 + $0x8] sm:$0xff]
    %v86 = vld [vmem:[#allocation7 + $0x10] sm:$0xff]
    %v87 = vld [vmem:[#allocation7 + $0x18] sm:$0xff]
    %v88 = vld [vmem:[#allocation7 + $0x20] sm:$0xff]
    %v89 = vld [vmem:[#allocation7 + $0x28] sm:$0xff]
    %v90 = vld [vmem:[#allocation7 + $0x30] sm:$0xff]
    %v91 = vld [vmem:[#allocation7 + $0x38] sm:$0xff]
    %v92 = vld [vmem:[#allocation7 + $0x40] sm:$0xff]
    %v93 = vld [vmem:[#allocation7 + $0x48] sm:$0xff]
    %v94 = vld [vmem:[#allocation7 + $0x50] sm:$0xff]
    %v95 = vld [vmem:[#allocation7 + $0x58] sm:$0xff]
    %v96 = vld [vmem:[#allocation7 + $0x60] sm:$0xff]
    %v97 = vld [vmem:[#allocation7 + $0x68] sm:$0xff]
    %v98 = vld [vmem:[#allocation7 + $0x70] sm:$0xff]
    %v99 = vld [vmem:[#allocation7 + $0x78] sm:$0xff]
    %vm100 = vcmask 130048
    %v102 = vsel %vm100, %v84, 0
    %v105 = vsel %vm100, %v85, 0
    %v108 = vsel %vm100, %v86, 0
    %v111 = vsel %vm100, %v87, 0
    %v114 = vsel %vm100, %v88, 0
    %v117 = vsel %vm100, %v89, 0
    %v120 = vsel %vm100, %v90, 0
    %v123 = vsel %vm100, %v91, 0
    %v126 = vsel %vm100, %v92, 0
    %v129 = vsel %vm100, %v93, 0
    %v132 = vsel %vm100, %v94, 0
    %v135 = vsel %vm100, %v95, 0
    %v138 = vsel %vm100, %v96, 0
    %v141 = vsel %vm100, %v97, 0
    %v144 = vsel %vm100, %v98, 0
    %v147 = vsel %vm100, %v99, 0
    %149 = vmatprep.subr.mxu0 0.0
    %150 = vmatpush1.msra.mxu0 %v82
    %151 = vmatprep.subr.mxu0 0.0
    %152 = vmatpush1.msra.mxu0 %v83
    %153 = vmatprep.subr.mxu0 0.0
    %154 = vmatpush1.msra.mxu0 0.0
    %155 = vmatprep.subr.mxu0 0.0
    %156 = vmatpush1.msra.mxu0 0.0
    %157 = vmatprep.subr.mxu0 0.0
    %158 = vmatpush1.msra.mxu0 0.0
    %159 = vmatprep.subr.mxu0 0.0
    %160 = vmatpush1.msra.mxu0 0.0
    %161 = vmatprep.subr.mxu0 0.0
    %162 = vmatpush1.msra.mxu0 0.0
    %163 = vmatprep.subr.mxu0 0.0
    %164 = vmatpush1.msra.mxu0 0.0
    %165 = vmatprep.subr.mxu0 0.0
    %166 = vmatpush1.msra.mxu0 0.0
    %167 = vmatprep.subr.mxu0 0.0
    %168 = vmatpush1.msra.mxu0 0.0
    %169 = vmatprep.subr.mxu0 0.0
    %170 = vmatpush1.msra.mxu0 0.0
    %171 = vmatprep.subr.mxu0 0.0
    %172 = vmatpush1.msra.mxu0 0.0
    %173 = vmatprep.subr.mxu0 0.0
    %174 = vmatpush1.msra.mxu0 0.0
    %175 = vmatprep.subr.mxu0 0.0
    %176 = vmatpush1.msra.mxu0 0.0
    %177 = vmatprep.subr.mxu0 0.0
    %178 = vmatpush1.msra.mxu0 0.0
    %179 = vmatprep.subr.mxu0 0.0
    %180 = vmatpush1.msra.mxu0 0.0
    %181 = vmatprep.subr.mxu0 0.0
    %182 = vmatpush1.msra.mxu0 0.0
    %183 = vmatprep.subr.mxu0 0.0
    %184 = vmatpush1.msra.mxu0 0.0
    %185 = vmatprep.subr.mxu0 0.0
    %186 = vmatpush1.msra.mxu0 0.0
    %187 = vmatprep.subr.mxu0 0.0
    %188 = vmatpush1.msra.mxu0 0.0
    %189 = vmatprep.subr.mxu0 0.0
    %190 = vmatpush1.msra.mxu0 0.0
    %191 = vmatprep.subr.mxu0 0.0
    %192 = vmatpush1.msra.mxu0 0.0
    %193 = vmatprep.subr.mxu0 0.0
    %194 = vmatpush1.msra.mxu0 0.0
    %195 = vmatprep.subr.mxu0 0.0
    %196 = vmatpush1.msra.mxu0 0.0
    %197 = vmatprep.subr.mxu0 0.0
    %198 = vmatpush1.msra.mxu0 0.0
    %199 = vmatprep.subr.mxu0 0.0
    %200 = vmatpush1.msra.mxu0 0.0
    %201 = vmatprep.subr.mxu0 0.0
    %202 = vmatpush1.msra.mxu0 0.0
    %203 = vmatprep.subr.mxu0 0.0
    %204 = vmatpush1.msra.mxu0 0.0
    %205 = vmatprep.subr.mxu0 0.0
    %206 = vmatpush1.msra.mxu0 0.0
    %207 = vmatprep.subr.mxu0 0.0
    %208 = vmatpush1.msra.mxu0 0.0
    %209 = vmatprep.subr.mxu0 0.0
    %210 = vmatpush1.msra.mxu0 0.0
    %211 = vmatprep.subr.mxu0 0.0
    %212 = vmatpush1.msra.mxu0 0.0
    %213 = vmatprep.mubr.f32.mxu0 0.0
    %214 = vmatmul.mubr.f32.gmra.mrb[0].mxu0 %v102
    %v215 = vpop.f32.mrb[0].mxu0
    %v216 = vadd.f32 0.0, %v215
    %v217 = vpop.f32.mrb[0].mxu0
    %218 = vmatprep.mubr.f32.mxu0 0.0
    %219 = vmatmul.mubr.f32.gmra.mrb[0].mxu0 %v105
    %v220 = vpop.f32.mrb[0].mxu0
    %v221 = vadd.f32 0.0, %v220
    %v222 = vpop.f32.mrb[0].mxu0
    %223 = vmatprep.mubr.f32.mxu0 0.0
    %224 = vmatmul.mubr.f32.gmra.mrb[0].mxu0 %v108
    %v225 = vpop.f32.mrb[0].mxu0
    %v226 = vadd.f32 0.0, %v225
    %v227 = vpop.f32.mrb[0].mxu0
    %228 = vmatprep.mubr.f32.mxu0 0.0
    %229 = vmatmul.mubr.f32.gmra.mrb[0].mxu0 %v111
    %v230 = vpop.f32.mrb[0].mxu0
    %v231 = vadd.f32 0.0, %v230
    %v232 = vpop.f32.mrb[0].mxu0
    %233 = vmatprep.mubr.f32.mxu0 0.0
    %234 = vmatmul.mubr.f32.gmra.mrb[0].mxu0 %v114
    %v235 = vpop.f32.mrb[0].mxu0
    %v236 = vadd.f32 0.0, %v235
    %v237 = vpop.f32.mrb[0].mxu0
    %238 = vmatprep.mubr.f32.mxu0 0.0
    %239 = vmatmul.mubr.f32.gmra.mrb[0].mxu0 %v117
    %v240 = vpop.f32.mrb[0].mxu0
    %v241 = vadd.f32 0.0, %v240
    %v242 = vpop.f32.mrb[0].mxu0
    %243 = vmatprep.mubr.f32.mxu0 0.0
    %244 = vmatmul.mubr.f32.gmra.mrb[0].mxu0 %v120
    %v245 = vpop.f32.mrb[0].mxu0
    %v246 = vadd.f32 0.0, %v245
    %v247 = vpop.f32.mrb[0].mxu0
    %248 = vmatprep.mubr.f32.mxu0 0.0
    %249 = vmatmul.mubr.f32.gmra.mrb[0].mxu0 %v123
    %v250 = vpop.f32.mrb[0].mxu0
    %v251 = vadd.f32 0.0, %v250
    %v252 = vpop.f32.mrb[0].mxu0
    %253 = vmatprep.mubr.f32.mxu0 0.0
    %254 = vmatmul.mubr.f32.gmra.mrb[0].mxu0 %v126
    %v255 = vpop.f32.mrb[0].mxu0
    %v256 = vadd.f32 0.0, %v255
    %v257 = vpop.f32.mrb[0].mxu0
    %258 = vmatprep.mubr.f32.mxu0 0.0
    %259 = vmatmul.mubr.f32.gmra.mrb[0].mxu0 %v129
    %v260 = vpop.f32.mrb[0].mxu0
    %v261 = vadd.f32 0.0, %v260
    %v262 = vpop.f32.mrb[0].mxu0
    %263 = vmatprep.mubr.f32.mxu0 0.0
    %264 = vmatmul.mubr.f32.gmra.mrb[0].mxu0 %v132
    %v265 = vpop.f32.mrb[0].mxu0
    %v266 = vadd.f32 0.0, %v265
    %v267 = vpop.f32.mrb[0].mxu0
    %268 = vmatprep.mubr.f32.mxu0 0.0
    %269 = vmatmul.mubr.f32.gmra.mrb[0].mxu0 %v135
    %v270 = vpop.f32.mrb[0].mxu0
    %v271 = vadd.f32 0.0, %v270
    %v272 = vpop.f32.mrb[0].mxu0
    %273 = vmatprep.mubr.f32.mxu0 0.0
    %274 = vmatmul.mubr.f32.gmra.mrb[0].mxu0 %v138
    %v275 = vpop.f32.mrb[0].mxu0
    %v276 = vadd.f32 0.0, %v275
    %v277 = vpop.f32.mrb[0].mxu0
    %278 = vmatprep.mubr.f32.mxu0 0.0
    %279 = vmatmul.mubr.f32.gmra.mrb[0].mxu0 %v141
    %v280 = vpop.f32.mrb[0].mxu0
    %v281 = vadd.f32 0.0, %v280
    %v282 = vpop.f32.mrb[0].mxu0
    %283 = vmatprep.mubr.f32.mxu0 0.0
    %284 = vmatmul.mubr.f32.gmra.mrb[0].mxu0 %v144
    %v285 = vpop.f32.mrb[0].mxu0
    %v286 = vadd.f32 0.0, %v285
    %v287 = vpop.f32.mrb[0].mxu0
    %288 = vmatprep.mubr.f32.mxu0 0.0
    %289 = vmatmul.mubr.f32.gmra.mrb[0].mxu0 %v147
    %v290 = vpop.f32.mrb[0].mxu0
    %v291 = vadd.f32 0.0, %v290
    %v292 = vpop.f32.mrb[0].mxu0
    %293 = vdwg.mxu0
    %v294 = vld [vmem:[#allocation7] sm:$0xff]
    %v295 = vld [vmem:[#allocation7 + $0x8] sm:$0xff]
    %v296 = vld [vmem:[#allocation4] sm:$0xff]
    %v297 = vld [vmem:[#allocation4 + $0x8] sm:$0xff]
    %v299 = vsel %vm100, %v80, 0
    %v302 = vsel %vm100, %v81, 0
    %304 = vmatprep.subr.mxu0 0.0
    %305 = vmatpush1.msra.mxu0 %v216
    %306 = vmatprep.subr.mxu0 0.0
    %307 = vmatpush1.msra.mxu0 %v221
    %308 = vmatprep.subr.mxu0 0.0
    %309 = vmatpush1.msra.mxu0 0.0
    %310 = vmatprep.subr.mxu0 0.0
    %311 = vmatpush1.msra.mxu0 0.0
    %312 = vmatprep.subr.mxu0 0.0
    %313 = vmatpush1.msra.mxu0 0.0
    %314 = vmatprep.subr.mxu0 0.0
    %315 = vmatpush1.msra.mxu0 0.0
    %316 = vmatprep.subr.mxu0 0.0
    %317 = vmatpush1.msra.mxu0 0.0
    %318 = vmatprep.subr.mxu0 0.0
    %319 = vmatpush1.msra.mxu0 0.0
    %320 = vmatprep.subr.mxu0 0.0
    %321 = vmatpush1.msra.mxu0 0.0
    %322 = vmatprep.subr.mxu0 0.0
    %323 = vmatpush1.msra.mxu0 0.0
    %324 = vmatprep.subr.mxu0 0.0
    %325 = vmatpush1.msra.mxu0 0.0
    %326 = vmatprep.subr.mxu0 0.0
    %327 = vmatpush1.msra.mxu0 0.0
    %328 = vmatprep.subr.mxu0 0.0
    %329 = vmatpush1.msra.mxu0 0.0
    %330 = vmatprep.subr.mxu0 0.0
    %331 = vmatpush1.msra.mxu0 0.0
    %332 = vmatprep.subr.mxu0 0.0
    %333 = vmatpush1.msra.mxu0 0.0
    %334 = vmatprep.subr.mxu0 0.0
    %335 = vmatpush1.msra.mxu0 0.0
    %336 = vmatprep.subr.mxu0 0.0
    %337 = vmatpush1.msra.mxu0 0.0
    %338 = vmatprep.subr.mxu0 0.0
    %339 = vmatpush1.msra.mxu0 0.0
    %340 = vmatprep.subr.mxu0 0.0
    %341 = vmatpush1.msra.mxu0 0.0
    %342 = vmatprep.subr.mxu0 0.0
    %343 = vmatpush1.msra.mxu0 0.0
    %344 = vmatprep.subr.mxu0 0.0
    %345 = vmatpush1.msra.mxu0 0.0
    %346 = vmatprep.subr.mxu0 0.0
    %347 = vmatpush1.msra.mxu0 0.0
    %348 = vmatprep.subr.mxu0 0.0
    %349 = vmatpush1.msra.mxu0 0.0
    %350 = vmatprep.subr.mxu0 0.0
    %351 = vmatpush1.msra.mxu0 0.0
    %352 = vmatprep.subr.mxu0 0.0
    %353 = vmatpush1.msra.mxu0 0.0
    %354 = vmatprep.subr.mxu0 0.0
    %355 = vmatpush1.msra.mxu0 0.0
    %356 = vmatprep.subr.mxu0 0.0
    %357 = vmatpush1.msra.mxu0 0.0
    %358 = vmatprep.subr.mxu0 0.0
    %359 = vmatpush1.msra.mxu0 0.0
    %360 = vmatprep.subr.mxu0 0.0
    %361 = vmatpush1.msra.mxu0 0.0
    %362 = vmatprep.subr.mxu0 0.0
    %363 = vmatpush1.msra.mxu0 0.0
    %364 = vmatprep.subr.mxu0 0.0
    %365 = vmatpush1.msra.mxu0 0.0
    %366 = vmatprep.subr.mxu0 0.0
    %367 = vmatpush1.msra.mxu0 0.0
    %368 = vmatprep.mubr.f32.mxu0 0.0
    %369 = vmatmul.mubr.f32.gmra.mrb[0].mxu0 %v299
    %v370 = vpop.f32.mrb[0].mxu0
    %v371 = vadd.f32 0.0, %v370
    %v372 = vpop.f32.mrb[0].mxu0
    %373 = vmatprep.mubr.f32.mxu0 0.0
    %374 = vmatmul.mubr.f32.gmra.mrb[0].mxu0 %v302
    %v375 = vpop.f32.mrb[0].mxu0
    %v376 = vadd.f32 0.0, %v375
    %v377 = vpop.f32.mrb[0].mxu0
    %378 = vdwg.mxu0
    %v379 = vmul.f32 %v371, 0.0010405828
    %v380 = vmul.f32 %v376, 0.0010405828
    %v381 = vsub.f32 %v379, %v294
    %v382 = vsub.f32 %v380, %v295
    %v383 = vand.u32 2147483647, %v381
    %v384 = vand.u32 2147483647, %v382
    %v385 = vmul.f32 %v383, 5.0
    %v386 = vmul.f32 %v384, 5.0
    %v387 = vadd.f32 %v385, 1.0
    %v388 = vadd.f32 %v386, 1.0
    %v389 = vand.u32 2147483647, %v296
    %v390 = vand.u32 2147483647, %v297
    %v391 = vsub.f32 0.0, %v389
    %v392 = vsub.f32 0.0, %v390
    %v393 = vmul.f32 %v391, 1.442695
    %v394 = vpow.pop %v393
    %v395 = vmul.f32 %v392, 1.442695
    %v396 = vpow.pop %v395
    %v397 = vmax.f32 %v296, 0.0
    %v398 = vmax.f32 %v297, 0.0
    %v399 = vmul.f32 %v296, %v294
    %v400 = vmul.f32 %v297, %v295
    %v401 = vsub.f32 %v397, %v399
    %v402 = vsub.f32 %v398, %v400
    %v403 = vadd.f32 %v394, 1.0
    %v404 = vadd.f32 %v396, 1.0
    %v405 = vlog2.pop %v403
    %v406 = vmul.f32 %v405, 0.6931472
    %v407 = vlog2.pop %v404
    %v408 = vmul.f32 %v407, 0.6931472
    %v409 = vadd.f32 %v401, %v406
    %v410 = vadd.f32 %v402, %v408
    %v411 = vrcp.pop %v403
    %v412 = vmul.f32 1.0, %v411
    %v413 = vrcp.pop %v404
    %v414 = vmul.f32 1.0, %v413
    %vm415 = vcmp.ge.f32.partialorder %v296, 0.0
    %vm416 = vcmp.ge.f32.partialorder %v297, 0.0
    %v417 = vmul.f32 %v394, %v412
    %v418 = vmul.f32 %v396, %v414
    %v419 = vsel %vm415, %v412, %v417
    %v420 = vsel %vm416, %v414, %v418
    %v421 = vmul.f32 %v419, %v294
    %v422 = vmul.f32 %v420, %v295
    %v423 = vmul.f32 %v421, %v387
    %v424 = vmul.f32 %v422, %v388
    %v425 = vsel %vm100, %v423, 0.0
    %v426 = vsel %vm100, %v424, 0.0
    %v427 = vadd.f32 %v425, %v426
    %428 = vadd.xlane.f32.xlu0 %v427
    %v429 = vpop.xlane.xlu0 %428
    %v430 = vrot.slane %v429, 4
    %v431 = vadd.f32 %v429, %v430
    %v432 = vrot.slane %v431, 2
    %v433 = vadd.f32 %v431, %v432
    %v434 = vrot.slane %v433, 1
    %v435 = vadd.f32 %v433, %v434
    %s436 = vtos %v435
    %v437 = vadd.f32 %v419, %v294
    %v438 = vadd.f32 %v420, %v295
    %v439 = vmul.f32 %v437, %v387
    %v440 = vmul.f32 %v438, %v388
    %v441 = vsel %vm100, %v439, 0.0
    %v442 = vsel %vm100, %v440, 0.0
    %v443 = vadd.f32 %v441, %v442
    %444 = vadd.xlane.f32.xlu0 %v443
    %v445 = vpop.xlane.xlu0 %444
    %v446 = vrot.slane %v445, 4
    %v447 = vadd.f32 %v445, %v446
    %v448 = vrot.slane %v447, 2
    %v449 = vadd.f32 %v447, %v448
    %v450 = vrot.slane %v449, 1
    %v451 = vadd.f32 %v449, %v450
    %s452 = vtos %v451
    %s453 = sadd.f32 %s436, 1.0
    %s454 = ssub.f32 %s452, %s436
    %s455 = sadd.f32 %s454, 1.0
    %v456 = vstv %s455
    %v457 = vrcp.pop %v456
    %s458 = vtos %v457
    %s459 = smul.f32 %s453, %s458
    %s460 = ssub.f32 1.0, %s459
    %v461 = vsel %vm100, %v409, 0.0
    %v462 = vsel %vm100, %v410, 0.0
    %v463 = vadd.f32 %v461, %v462
    %464 = vadd.xlane.f32.xlu0 %v463
    %v465 = vpop.xlane.xlu0 %464
    %v466 = vrot.slane %v465, 4
    %v467 = vadd.f32 %v465, %v466
    %v468 = vrot.slane %v467, 2
    %v469 = vadd.f32 %v467, %v468
    %v470 = vrot.slane %v469, 1
    %v471 = vadd.f32 %v469, %v470
    %s472 = vtos %v471
    %v473 = vstv %s472
    %v474 = vadd.f32 %v473, 0.0
    %v475 = vstv %s460
    %v476 = vadd.f32 %v475, 0.0
    %s477 = scalar_lea.vmem [#allocation7], 16
    %v478 = vld [vmem:[%s477] sm:$0xff]
    %v479 = vld [vmem:[%s477 + $0x8] sm:$0xff]
    %s480 = scalar_lea.vmem [#allocation4], 16
    %v481 = vld [vmem:[%s480] sm:$0xff]
    %v482 = vld [vmem:[%s480 + $0x8] sm:$0xff]
    %483 = vmatprep.subr.mxu0 0.0
    %484 = vmatpush1.msra.mxu0 %v226
    %485 = vmatprep.subr.mxu0 0.0
    %486 = vmatpush1.msra.mxu0 %v231
    %487 = vmatprep.subr.mxu0 0.0
    %488 = vmatpush1.msra.mxu0 0.0
    %489 = vmatprep.subr.mxu0 0.0
    %490 = vmatpush1.msra.mxu0 0.0
    %491 = vmatprep.subr.mxu0 0.0
    %492 = vmatpush1.msra.mxu0 0.0
    %493 = vmatprep.subr.mxu0 0.0
    %494 = vmatpush1.msra.mxu0 0.0
    %495 = vmatprep.subr.mxu0 0.0
    %496 = vmatpush1.msra.mxu0 0.0
    %497 = vmatprep.subr.mxu0 0.0
    %498 = vmatpush1.msra.mxu0 0.0
    %499 = vmatprep.subr.mxu0 0.0
    %500 = vmatpush1.msra.mxu0 0.0
    %501 = vmatprep.subr.mxu0 0.0
    %502 = vmatpush1.msra.mxu0 0.0
    %503 = vmatprep.subr.mxu0 0.0
    %504 = vmatpush1.msra.mxu0 0.0
    %505 = vmatprep.subr.mxu0 0.0
    %506 = vmatpush1.msra.mxu0 0.0
    %507 = vmatprep.subr.mxu0 0.0
    %508 = vmatpush1.msra.mxu0 0.0
    %509 = vmatprep.subr.mxu0 0.0
    %510 = vmatpush1.msra.mxu0 0.0
    %511 = vmatprep.subr.mxu0 0.0
    %512 = vmatpush1.msra.mxu0 0.0
    %513 = vmatprep.subr.mxu0 0.0
    %514 = vmatpush1.msra.mxu0 0.0
    %515 = vmatprep.subr.mxu0 0.0
    %516 = vmatpush1.msra.mxu0 0.0
    %517 = vmatprep.subr.mxu0 0.0
    %518 = vmatpush1.msra.mxu0 0.0
    %519 = vmatprep.subr.mxu0 0.0
    %520 = vmatpush1.msra.mxu0 0.0
    %521 = vmatprep.subr.mxu0 0.0
    %522 = vmatpush1.msra.mxu0 0.0
    %523 = vmatprep.subr.mxu0 0.0
    %524 = vmatpush1.msra.mxu0 0.0
    %525 = vmatprep.subr.mxu0 0.0
    %526 = vmatpush1.msra.mxu0 0.0
    %527 = vmatprep.subr.mxu0 0.0
    %528 = vmatpush1.msra.mxu0 0.0
    %529 = vmatprep.subr.mxu0 0.0
    %530 = vmatpush1.msra.mxu0 0.0
    %531 = vmatprep.subr.mxu0 0.0
    %532 = vmatpush1.msra.mxu0 0.0
    %533 = vmatprep.subr.mxu0 0.0
    %534 = vmatpush1.msra.mxu0 0.0
    %535 = vmatprep.subr.mxu0 0.0
    %536 = vmatpush1.msra.mxu0 0.0
    %537 = vmatprep.subr.mxu0 0.0
    %538 = vmatpush1.msra.mxu0 0.0
    %539 = vmatprep.subr.mxu0 0.0
    %540 = vmatpush1.msra.mxu0 0.0
    %541 = vmatprep.subr.mxu0 0.0
    %542 = vmatpush1.msra.mxu0 0.0
    %543 = vmatprep.subr.mxu0 0.0
    %544 = vmatpush1.msra.mxu0 0.0
    %545 = vmatprep.subr.mxu0 0.0
    %546 = vmatpush1.msra.mxu0 0.0
    %547 = vmatprep.mubr.f32.mxu0 0.0
    %548 = vmatmul.mubr.f32.gmra.mrb[0].mxu0 %v299
    %v549 = vpop.f32.mrb[0].mxu0
    %v550 = vadd.f32 0.0, %v549
    %v551 = vpop.f32.mrb[0].mxu0
    %552 = vmatprep.mubr.f32.mxu0 0.0
    %553 = vmatmul.mubr.f32.gmra.mrb[0].mxu0 %v302
    %v554 = vpop.f32.mrb[0].mxu0
    %v555 = vadd.f32 0.0, %v554
    %v556 = vpop.f32.mrb[0].mxu0
    %557 = vdwg.mxu0
    %v558 = vmul.f32 %v550, 0.0010405828
    %v559 = vmul.f32 %v555, 0.0010405828
    %v560 = vsub.f32 %v558, %v478
    %v561 = vsub.f32 %v559, %v479
    %v562 = vand.u32 2147483647, %v560
    %v563 = vand.u32 2147483647, %v561
    %v564 = vmul.f32 %v562, 5.0
    %v565 = vmul.f32 %v563, 5.0
    %v566 = vadd.f32 %v564, 1.0
    %v567 = vadd.f32 %v565, 1.0
    %v568 = vand.u32 2147483647, %v481
    %v569 = vand.u32 2147483647, %v482
    %v570 = vsub.f32 0.0, %v568
    %v571 = vsub.f32 0.0, %v569
    %v572 = vmul.f32 %v570, 1.442695
    %v573 = vpow.pop %v572
    %v574 = vmul.f32 %v571, 1.442695
    %v575 = vpow.pop %v574
    %v576 = vmax.f32 %v481, 0.0
    %v577 = vmax.f32 %v482, 0.0
    %v578 = vmul.f32 %v481, %v478
    %v579 = vmul.f32 %v482, %v479
    %v580 = vsub.f32 %v576, %v578
    %v581 = vsub.f32 %v577, %v579
    %v582 = vadd.f32 %v573, 1.0
    %v583 = vadd.f32 %v575, 1.0
    %v584 = vlog2.pop %v582
    %v585 = vmul.f32 %v584, 0.6931472
    %v586 = vlog2.pop %v583
    %v587 = vmul.f32 %v586, 0.6931472
    %v588 = vadd.f32 %v580, %v585
    %v589 = vadd.f32 %v581, %v587
    %v590 = vrcp.pop %v582
    %v591 = vmul.f32 1.0, %v590
    %v592 = vrcp.pop %v583
    %v593 = vmul.f32 1.0, %v592
    %vm594 = vcmp.ge.f32.partialorder %v481, 0.0
    %vm595 = vcmp.ge.f32.partialorder %v482, 0.0
    %v596 = vmul.f32 %v573, %v591
    %v597 = vmul.f32 %v575, %v593
    %v598 = vsel %vm594, %v591, %v596
    %v599 = vsel %vm595, %v593, %v597
    %v600 = vmul.f32 %v598, %v478
    %v601 = vmul.f32 %v599, %v479
    %v602 = vmul.f32 %v600, %v566
    %v603 = vmul.f32 %v601, %v567
    %v604 = vsel %vm100, %v602, 0.0
    %v605 = vsel %vm100, %v603, 0.0
    %v606 = vadd.f32 %v604, %v605
    %607 = vadd.xlane.f32.xlu0 %v606
    %v608 = vpop.xlane.xlu0 %607
    %v609 = vrot.slane %v608, 4
    %v610 = vadd.f32 %v608, %v609
    %v611 = vrot.slane %v610, 2
    %v612 = vadd.f32 %v610, %v611
    %v613 = vrot.slane %v612, 1
    %v614 = vadd.f32 %v612, %v613
    %s615 = vtos %v614
    %v616 = vadd.f32 %v598, %v478
    %v617 = vadd.f32 %v599, %v479
    %v618 = vmul.f32 %v616, %v566
    %v619 = vmul.f32 %v617, %v567
    %v620 = vsel %vm100, %v618, 0.0
    %v621 = vsel %vm100, %v619, 0.0
    %v622 = vadd.f32 %v620, %v621
    %623 = vadd.xlane.f32.xlu0 %v622
    %v624 = vpop.xlane.xlu0 %623
    %v625 = vrot.slane %v624, 4
    %v626 = vadd.f32 %v624, %v625
    %v627 = vrot.slane %v626, 2
    %v628 = vadd.f32 %v626, %v627
    %v629 = vrot.slane %v628, 1
    %v630 = vadd.f32 %v628, %v629
    %s631 = vtos %v630
    %s632 = sadd.f32 %s615, 1.0
    %s633 = ssub.f32 %s631, %s615
    %s634 = sadd.f32 %s633, 1.0
    %v635 = vstv %s634
    %v636 = vrcp.pop %v635
    %s637 = vtos %v636
    %s638 = smul.f32 %s632, %s637
    %s639 = ssub.f32 1.0, %s638
    %v640 = vsel %vm100, %v588, 0.0
    %v641 = vsel %vm100, %v589, 0.0
    %v642 = vadd.f32 %v640, %v641
    %643 = vadd.xlane.f32.xlu0 %v642
    %v644 = vpop.xlane.xlu0 %643
    %v645 = vrot.slane %v644, 4
    %v646 = vadd.f32 %v644, %v645
    %v647 = vrot.slane %v646, 2
    %v648 = vadd.f32 %v646, %v647
    %v649 = vrot.slane %v648, 1
    %v650 = vadd.f32 %v648, %v649
    %s651 = vtos %v650
    %v652 = vstv %s651
    %v653 = vadd.f32 %v474, %v652
    %v654 = vstv %s639
    %v655 = vadd.f32 %v476, %v654
    %s656 = scalar_lea.vmem [#allocation7], 32
    %v657 = vld [vmem:[%s656] sm:$0xff]
    %v658 = vld [vmem:[%s656 + $0x8] sm:$0xff]
    %s659 = scalar_lea.vmem [#allocation4], 32
    %v660 = vld [vmem:[%s659] sm:$0xff]
    %v661 = vld [vmem:[%s659 + $0x8] sm:$0xff]
    %662 = vmatprep.subr.mxu0 0.0
    %663 = vmatpush1.msra.mxu0 %v236
    %664 = vmatprep.subr.mxu0 0.0
    %665 = vmatpush1.msra.mxu0 %v241
    %666 = vmatprep.subr.mxu0 0.0
    %667 = vmatpush1.msra.mxu0 0.0
    %668 = vmatprep.subr.mxu0 0.0
    %669 = vmatpush1.msra.mxu0 0.0
    %670 = vmatprep.subr.mxu0 0.0
    %671 = vmatpush1.msra.mxu0 0.0
    %672 = vmatprep.subr.mxu0 0.0
    %673 = vmatpush1.msra.mxu0 0.0
    %674 = vmatprep.subr.mxu0 0.0
    %675 = vmatpush1.msra.mxu0 0.0
    %676 = vmatprep.subr.mxu0 0.0
    %677 = vmatpush1.msra.mxu0 0.0
    %678 = vmatprep.subr.mxu0 0.0
    %679 = vmatpush1.msra.mxu0 0.0
    %680 = vmatprep.subr.mxu0 0.0
    %681 = vmatpush1.msra.mxu0 0.0
    %682 = vmatprep.subr.mxu0 0.0
    %683 = vmatpush1.msra.mxu0 0.0
    %684 = vmatprep.subr.mxu0 0.0
    %685 = vmatpush1.msra.mxu0 0.0
    %686 = vmatprep.subr.mxu0 0.0
    %687 = vmatpush1.msra.mxu0 0.0
    %688 = vmatprep.subr.mxu0 0.0
    %689 = vmatpush1.msra.mxu0 0.0
    %690 = vmatprep.subr.mxu0 0.0
    %691 = vmatpush1.msra.mxu0 0.0
    %692 = vmatprep.subr.mxu0 0.0
    %693 = vmatpush1.msra.mxu0 0.0
    %694 = vmatprep.subr.mxu0 0.0
    %695 = vmatpush1.msra.mxu0 0.0
    %696 = vmatprep.subr.mxu0 0.0
    %697 = vmatpush1.msra.mxu0 0.0
    %698 = vmatprep.subr.mxu0 0.0
    %699 = vmatpush1.msra.mxu0 0.0
    %700 = vmatprep.subr.mxu0 0.0
    %701 = vmatpush1.msra.mxu0 0.0
    %702 = vmatprep.subr.mxu0 0.0
    %703 = vmatpush1.msra.mxu0 0.0
    %704 = vmatprep.subr.mxu0 0.0
    %705 = vmatpush1.msra.mxu0 0.0
    %706 = vmatprep.subr.mxu0 0.0
    %707 = vmatpush1.msra.mxu0 0.0
    %708 = vmatprep.subr.mxu0 0.0
    %709 = vmatpush1.msra.mxu0 0.0
    %710 = vmatprep.subr.mxu0 0.0
    %711 = vmatpush1.msra.mxu0 0.0
    %712 = vmatprep.subr.mxu0 0.0
    %713 = vmatpush1.msra.mxu0 0.0
    %714 = vmatprep.subr.mxu0 0.0
    %715 = vmatpush1.msra.mxu0 0.0
    %716 = vmatprep.subr.mxu0 0.0
    %717 = vmatpush1.msra.mxu0 0.0
    %718 = vmatprep.subr.mxu0 0.0
    %719 = vmatpush1.msra.mxu0 0.0
    %720 = vmatprep.subr.mxu0 0.0
    %721 = vmatpush1.msra.mxu0 0.0
    %722 = vmatprep.subr.mxu0 0.0
    %723 = vmatpush1.msra.mxu0 0.0
    %724 = vmatprep.subr.mxu0 0.0
    %725 = vmatpush1.msra.mxu0 0.0
    %726 = vmatprep.mubr.f32.mxu0 0.0
    %727 = vmatmul.mubr.f32.gmra.mrb[0].mxu0 %v299
    %v728 = vpop.f32.mrb[0].mxu0
    %v729 = vadd.f32 0.0, %v728
    %v730 = vpop.f32.mrb[0].mxu0
    %731 = vmatprep.mubr.f32.mxu0 0.0
    %732 = vmatmul.mubr.f32.gmra.mrb[0].mxu0 %v302
    %v733 = vpop.f32.mrb[0].mxu0
    %v734 = vadd.f32 0.0, %v733
    %v735 = vpop.f32.mrb[0].mxu0
    %736 = vdwg.mxu0
    %v737 = vmul.f32 %v729, 0.0010405828
    %v738 = vmul.f32 %v734, 0.0010405828
    %v739 = vsub.f32 %v737, %v657
    %v740 = vsub.f32 %v738, %v658
    %v741 = vand.u32 2147483647, %v739
    %v742 = vand.u32 2147483647, %v740
    %v743 = vmul.f32 %v741, 5.0
    %v744 = vmul.f32 %v742, 5.0
    %v745 = vadd.f32 %v743, 1.0
    %v746 = vadd.f32 %v744, 1.0
    %v747 = vand.u32 2147483647, %v660
    %v748 = vand.u32 2147483647, %v661
    %v749 = vsub.f32 0.0, %v747
    %v750 = vsub.f32 0.0, %v748
    %v751 = vmul.f32 %v749, 1.442695
    %v752 = vpow.pop %v751
    %v753 = vmul.f32 %v750, 1.442695
    %v754 = vpow.pop %v753
    %v755 = vmax.f32 %v660, 0.0
    %v756 = vmax.f32 %v661, 0.0
    %v757 = vmul.f32 %v660, %v657
    %v758 = vmul.f32 %v661, %v658
    %v759 = vsub.f32 %v755, %v757
    %v760 = vsub.f32 %v756, %v758
    %v761 = vadd.f32 %v752, 1.0
    %v762 = vadd.f32 %v754, 1.0
    %v763 = vlog2.pop %v761
    %v764 = vmul.f32 %v763, 0.6931472
    %v765 = vlog2.pop %v762
    %v766 = vmul.f32 %v765, 0.6931472
    %v767 = vadd.f32 %v759, %v764
    %v768 = vadd.f32 %v760, %v766
    %v769 = vrcp.pop %v761
    %v770 = vmul.f32 1.0, %v769
    %v771 = vrcp.pop %v762
    %v772 = vmul.f32 1.0, %v771
    %vm773 = vcmp.ge.f32.partialorder %v660, 0.0
    %vm774 = vcmp.ge.f32.partialorder %v661, 0.0
    %v775 = vmul.f32 %v752, %v770
    %v776 = vmul.f32 %v754, %v772
    %v777 = vsel %vm773, %v770, %v775
    %v778 = vsel %vm774, %v772, %v776
    %v779 = vmul.f32 %v777, %v657
    %v780 = vmul.f32 %v778, %v658
    %v781 = vmul.f32 %v779, %v745
    %v782 = vmul.f32 %v780, %v746
    %v783 = vsel %vm100, %v781, 0.0
    %v784 = vsel %vm100, %v782, 0.0
    %v785 = vadd.f32 %v783, %v784
    %786 = vadd.xlane.f32.xlu0 %v785
    %v787 = vpop.xlane.xlu0 %786
    %v788 = vrot.slane %v787, 4
    %v789 = vadd.f32 %v787, %v788
    %v790 = vrot.slane %v789, 2
    %v791 = vadd.f32 %v789, %v790
    %v792 = vrot.slane %v791, 1
    %v793 = vadd.f32 %v791, %v792
    %s794 = vtos %v793
    %v795 = vadd.f32 %v777, %v657
    %v796 = vadd.f32 %v778, %v658
    %v797 = vmul.f32 %v795, %v745
    %v798 = vmul.f32 %v796, %v746
    %v799 = vsel %vm100, %v797, 0.0
    %v800 = vsel %vm100, %v798, 0.0
    %v801 = vadd.f32 %v799, %v800
    %802 = vadd.xlane.f32.xlu0 %v801
    %v803 = vpop.xlane.xlu0 %802
    %v804 = vrot.slane %v803, 4
    %v805 = vadd.f32 %v803, %v804
    %v806 = vrot.slane %v805, 2
    %v807 = vadd.f32 %v805, %v806
    %v808 = vrot.slane %v807, 1
    %v809 = vadd.f32 %v807, %v808
    %s810 = vtos %v809
    %s811 = sadd.f32 %s794, 1.0
    %s812 = ssub.f32 %s810, %s794
    %s813 = sadd.f32 %s812, 1.0
    %v814 = vstv %s813
    %v815 = vrcp.pop %v814
    %s816 = vtos %v815
    %s817 = smul.f32 %s811, %s816
    %s818 = ssub.f32 1.0, %s817
    %v819 = vsel %vm100, %v767, 0.0
    %v820 = vsel %vm100, %v768, 0.0
    %v821 = vadd.f32 %v819, %v820
    %822 = vadd.xlane.f32.xlu0 %v821
    %v823 = vpop.xlane.xlu0 %822
    %v824 = vrot.slane %v823, 4
    %v825 = vadd.f32 %v823, %v824
    %v826 = vrot.slane %v825, 2
    %v827 = vadd.f32 %v825, %v826
    %v828 = vrot.slane %v827, 1
    %v829 = vadd.f32 %v827, %v828
    %s830 = vtos %v829
    %v831 = vstv %s830
    %v832 = vadd.f32 %v653, %v831
    %v833 = vstv %s818
    %v834 = vadd.f32 %v655, %v833
    %s835 = scalar_lea.vmem [#allocation7], 48
    %v836 = vld [vmem:[%s835] sm:$0xff]
    %v837 = vld [vmem:[%s835 + $0x8] sm:$0xff]
    %s838 = scalar_lea.vmem [#allocation4], 48
    %v839 = vld [vmem:[%s838] sm:$0xff]
    %v840 = vld [vmem:[%s838 + $0x8] sm:$0xff]
    %841 = vmatprep.subr.mxu0 0.0
    %842 = vmatpush1.msra.mxu0 %v246
    %843 = vmatprep.subr.mxu0 0.0
    %844 = vmatpush1.msra.mxu0 %v251
    %845 = vmatprep.subr.mxu0 0.0
    %846 = vmatpush1.msra.mxu0 0.0
    %847 = vmatprep.subr.mxu0 0.0
    %848 = vmatpush1.msra.mxu0 0.0
    %849 = vmatprep.subr.mxu0 0.0
    %850 = vmatpush1.msra.mxu0 0.0
    %851 = vmatprep.subr.mxu0 0.0
    %852 = vmatpush1.msra.mxu0 0.0
    %853 = vmatprep.subr.mxu0 0.0
    %854 = vmatpush1.msra.mxu0 0.0
    %855 = vmatprep.subr.mxu0 0.0
    %856 = vmatpush1.msra.mxu0 0.0
    %857 = vmatprep.subr.mxu0 0.0
    %858 = vmatpush1.msra.mxu0 0.0
    %859 = vmatprep.subr.mxu0 0.0
    %860 = vmatpush1.msra.mxu0 0.0
    %861 = vmatprep.subr.mxu0 0.0
    %862 = vmatpush1.msra.mxu0 0.0
    %863 = vmatprep.subr.mxu0 0.0
    %864 = vmatpush1.msra.mxu0 0.0
    %865 = vmatprep.subr.mxu0 0.0
    %866 = vmatpush1.msra.mxu0 0.0
    %867 = vmatprep.subr.mxu0 0.0
    %868 = vmatpush1.msra.mxu0 0.0
    %869 = vmatprep.subr.mxu0 0.0
    %870 = vmatpush1.msra.mxu0 0.0
    %871 = vmatprep.subr.mxu0 0.0
    %872 = vmatpush1.msra.mxu0 0.0
    %873 = vmatprep.subr.mxu0 0.0
    %874 = vmatpush1.msra.mxu0 0.0
    %875 = vmatprep.subr.mxu0 0.0
    %876 = vmatpush1.msra.mxu0 0.0
    %877 = vmatprep.subr.mxu0 0.0
    %878 = vmatpush1.msra.mxu0 0.0
    %879 = vmatprep.subr.mxu0 0.0
    %880 = vmatpush1.msra.mxu0 0.0
    %881 = vmatprep.subr.mxu0 0.0
    %882 = vmatpush1.msra.mxu0 0.0
    %883 = vmatprep.subr.mxu0 0.0
    %884 = vmatpush1.msra.mxu0 0.0
    %885 = vmatprep.subr.mxu0 0.0
    %886 = vmatpush1.msra.mxu0 0.0
    %887 = vmatprep.subr.mxu0 0.0
    %888 = vmatpush1.msra.mxu0 0.0
    %889 = vmatprep.subr.mxu0 0.0
    %890 = vmatpush1.msra.mxu0 0.0
    %891 = vmatprep.subr.mxu0 0.0
    %892 = vmatpush1.msra.mxu0 0.0
    %893 = vmatprep.subr.mxu0 0.0
    %894 = vmatpush1.msra.mxu0 0.0
    %895 = vmatprep.subr.mxu0 0.0
    %896 = vmatpush1.msra.mxu0 0.0
    %897 = vmatprep.subr.mxu0 0.0
    %898 = vmatpush1.msra.mxu0 0.0
    %899 = vmatprep.subr.mxu0 0.0
    %900 = vmatpush1.msra.mxu0 0.0
    %901 = vmatprep.subr.mxu0 0.0
    %902 = vmatpush1.msra.mxu0 0.0
    %903 = vmatprep.subr.mxu0 0.0
    %904 = vmatpush1.msra.mxu0 0.0
    %905 = vmatprep.mubr.f32.mxu0 0.0
    %906 = vmatmul.mubr.f32.gmra.mrb[0].mxu0 %v299
    %v907 = vpop.f32.mrb[0].mxu0
    %v908 = vadd.f32 0.0, %v907
    %v909 = vpop.f32.mrb[0].mxu0
    %910 = vmatprep.mubr.f32.mxu0 0.0
    %911 = vmatmul.mubr.f32.gmra.mrb[0].mxu0 %v302
    %v912 = vpop.f32.mrb[0].mxu0
    %v913 = vadd.f32 0.0, %v912
    %v914 = vpop.f32.mrb[0].mxu0
    %915 = vdwg.mxu0
    %v916 = vmul.f32 %v908, 0.0010405828
    %v917 = vmul.f32 %v913, 0.0010405828
    %v918 = vsub.f32 %v916, %v836
    %v919 = vsub.f32 %v917, %v837
    %v920 = vand.u32 2147483647, %v918
    %v921 = vand.u32 2147483647, %v919
    %v922 = vmul.f32 %v920, 5.0
    %v923 = vmul.f32 %v921, 5.0
    %v924 = vadd.f32 %v922, 1.0
    %v925 = vadd.f32 %v923, 1.0
    %v926 = vand.u32 2147483647, %v839
    %v927 = vand.u32 2147483647, %v840
    %v928 = vsub.f32 0.0, %v926
    %v929 = vsub.f32 0.0, %v927
    %v930 = vmul.f32 %v928, 1.442695
    %v931 = vpow.pop %v930
    %v932 = vmul.f32 %v929, 1.442695
    %v933 = vpow.pop %v932
    %v934 = vmax.f32 %v839, 0.0
    %v935 = vmax.f32 %v840, 0.0
    %v936 = vmul.f32 %v839, %v836
    %v937 = vmul.f32 %v840, %v837
    %v938 = vsub.f32 %v934, %v936
    %v939 = vsub.f32 %v935, %v937
    %v940 = vadd.f32 %v931, 1.0
    %v941 = vadd.f32 %v933, 1.0
    %v942 = vlog2.pop %v940
    %v943 = vmul.f32 %v942, 0.6931472
    %v944 = vlog2.pop %v941
    %v945 = vmul.f32 %v944, 0.6931472
    %v946 = vadd.f32 %v938, %v943
    %v947 = vadd.f32 %v939, %v945
    %v948 = vrcp.pop %v940
    %v949 = vmul.f32 1.0, %v948
    %v950 = vrcp.pop %v941
    %v951 = vmul.f32 1.0, %v950
    %vm952 = vcmp.ge.f32.partialorder %v839, 0.0
    %vm953 = vcmp.ge.f32.partialorder %v840, 0.0
    %v954 = vmul.f32 %v931, %v949
    %v955 = vmul.f32 %v933, %v951
    %v956 = vsel %vm952, %v949, %v954
    %v957 = vsel %vm953, %v951, %v955
    %v958 = vmul.f32 %v956, %v836
    %v959 = vmul.f32 %v957, %v837
    %v960 = vmul.f32 %v958, %v924
    %v961 = vmul.f32 %v959, %v925
    %v962 = vsel %vm100, %v960, 0.0
    %v963 = vsel %vm100, %v961, 0.0
    %v964 = vadd.f32 %v962, %v963
    %965 = vadd.xlane.f32.xlu0 %v964
    %v966 = vpop.xlane.xlu0 %965
    %v967 = vrot.slane %v966, 4
    %v968 = vadd.f32 %v966, %v967
    %v969 = vrot.slane %v968, 2
    %v970 = vadd.f32 %v968, %v969
    %v971 = vrot.slane %v970, 1
    %v972 = vadd.f32 %v970, %v971
    %s973 = vtos %v972
    %v974 = vadd.f32 %v956, %v836
    %v975 = vadd.f32 %v957, %v837
    %v976 = vmul.f32 %v974, %v924
    %v977 = vmul.f32 %v975, %v925
    %v978 = vsel %vm100, %v976, 0.0
    %v979 = vsel %vm100, %v977, 0.0
    %v980 = vadd.f32 %v978, %v979
    %981 = vadd.xlane.f32.xlu0 %v980
    %v982 = vpop.xlane.xlu0 %981
    %v983 = vrot.slane %v982, 4
    %v984 = vadd.f32 %v982, %v983
    %v985 = vrot.slane %v984, 2
    %v986 = vadd.f32 %v984, %v985
    %v987 = vrot.slane %v986, 1
    %v988 = vadd.f32 %v986, %v987
    %s989 = vtos %v988
    %s990 = sadd.f32 %s973, 1.0
    %s991 = ssub.f32 %s989, %s973
    %s992 = sadd.f32 %s991, 1.0
    %v993 = vstv %s992
    %v994 = vrcp.pop %v993
    %s995 = vtos %v994
    %s996 = smul.f32 %s990, %s995
    %s997 = ssub.f32 1.0, %s996
    %v998 = vsel %vm100, %v946, 0.0
    %v999 = vsel %vm100, %v947, 0.0
    %v1000 = vadd.f32 %v998, %v999
    %1001 = vadd.xlane.f32.xlu0 %v1000
    %v1002 = vpop.xlane.xlu0 %1001
    %v1003 = vrot.slane %v1002, 4
    %v1004 = vadd.f32 %v1002, %v1003
    %v1005 = vrot.slane %v1004, 2
    %v1006 = vadd.f32 %v1004, %v1005
    %v1007 = vrot.slane %v1006, 1
    %v1008 = vadd.f32 %v1006, %v1007
    %s1009 = vtos %v1008
    %v1010 = vstv %s1009
    %v1011 = vadd.f32 %v832, %v1010
    %v1012 = vstv %s997
    %v1013 = vadd.f32 %v834, %v1012
    %s1014 = scalar_lea.vmem [#allocation7], 64
    %v1015 = vld [vmem:[%s1014] sm:$0xff]
    %v1016 = vld [vmem:[%s1014 + $0x8] sm:$0xff]
    %s1017 = scalar_lea.vmem [#allocation4], 64
    %v1018 = vld [vmem:[%s1017] sm:$0xff]
    %v1019 = vld [vmem:[%s1017 + $0x8] sm:$0xff]
    %1020 = vmatprep.subr.mxu0 0.0
    %1021 = vmatpush1.msra.mxu0 %v256
    %1022 = vmatprep.subr.mxu0 0.0
    %1023 = vmatpush1.msra.mxu0 %v261
    %1024 = vmatprep.subr.mxu0 0.0
    %1025 = vmatpush1.msra.mxu0 0.0
    %1026 = vmatprep.subr.mxu0 0.0
    %1027 = vmatpush1.msra.mxu0 0.0
    %1028 = vmatprep.subr.mxu0 0.0
    %1029 = vmatpush1.msra.mxu0 0.0
    %1030 = vmatprep.subr.mxu0 0.0
    %1031 = vmatpush1.msra.mxu0 0.0
    %1032 = vmatprep.subr.mxu0 0.0
    %1033 = vmatpush1.msra.mxu0 0.0
    %1034 = vmatprep.subr.mxu0 0.0
    %1035 = vmatpush1.msra.mxu0 0.0
    %1036 = vmatprep.subr.mxu0 0.0
    %1037 = vmatpush1.msra.mxu0 0.0
    %1038 = vmatprep.subr.mxu0 0.0
    %1039 = vmatpush1.msra.mxu0 0.0
    %1040 = vmatprep.subr.mxu0 0.0
    %1041 = vmatpush1.msra.mxu0 0.0
    %1042 = vmatprep.subr.mxu0 0.0
    %1043 = vmatpush1.msra.mxu0 0.0
    %1044 = vmatprep.subr.mxu0 0.0
    %1045 = vmatpush1.msra.mxu0 0.0
    %1046 = vmatprep.subr.mxu0 0.0
    %1047 = vmatpush1.msra.mxu0 0.0
    %1048 = vmatprep.subr.mxu0 0.0
    %1049 = vmatpush1.msra.mxu0 0.0
    %1050 = vmatprep.subr.mxu0 0.0
    %1051 = vmatpush1.msra.mxu0 0.0
    %1052 = vmatprep.subr.mxu0 0.0
    %1053 = vmatpush1.msra.mxu0 0.0
    %1054 = vmatprep.subr.mxu0 0.0
    %1055 = vmatpush1.msra.mxu0 0.0
    %1056 = vmatprep.subr.mxu0 0.0
    %1057 = vmatpush1.msra.mxu0 0.0
    %1058 = vmatprep.subr.mxu0 0.0
    %1059 = vmatpush1.msra.mxu0 0.0
    %1060 = vmatprep.subr.mxu0 0.0
    %1061 = vmatpush1.msra.mxu0 0.0
    %1062 = vmatprep.subr.mxu0 0.0
    %1063 = vmatpush1.msra.mxu0 0.0
    %1064 = vmatprep.subr.mxu0 0.0
    %1065 = vmatpush1.msra.mxu0 0.0
    %1066 = vmatprep.subr.mxu0 0.0
    %1067 = vmatpush1.msra.mxu0 0.0
    %1068 = vmatprep.subr.mxu0 0.0
    %1069 = vmatpush1.msra.mxu0 0.0
    %1070 = vmatprep.subr.mxu0 0.0
    %1071 = vmatpush1.msra.mxu0 0.0
    %1072 = vmatprep.subr.mxu0 0.0
    %1073 = vmatpush1.msra.mxu0 0.0
    %1074 = vmatprep.subr.mxu0 0.0
    %1075 = vmatpush1.msra.mxu0 0.0
    %1076 = vmatprep.subr.mxu0 0.0
    %1077 = vmatpush1.msra.mxu0 0.0
    %1078 = vmatprep.subr.mxu0 0.0
    %1079 = vmatpush1.msra.mxu0 0.0
    %1080 = vmatprep.subr.mxu0 0.0
    %1081 = vmatpush1.msra.mxu0 0.0
    %1082 = vmatprep.subr.mxu0 0.0
    %1083 = vmatpush1.msra.mxu0 0.0
    %1084 = vmatprep.mubr.f32.mxu0 0.0
    %1085 = vmatmul.mubr.f32.gmra.mrb[0].mxu0 %v299
    %v1086 = vpop.f32.mrb[0].mxu0
    %v1087 = vadd.f32 0.0, %v1086
    %v1088 = vpop.f32.mrb[0].mxu0
    %1089 = vmatprep.mubr.f32.mxu0 0.0
    %1090 = vmatmul.mubr.f32.gmra.mrb[0].mxu0 %v302
    %v1091 = vpop.f32.mrb[0].mxu0
    %v1092 = vadd.f32 0.0, %v1091
    %v1093 = vpop.f32.mrb[0].mxu0
    %1094 = vdwg.mxu0
    %v1095 = vmul.f32 %v1087, 0.0010405828
    %v1096 = vmul.f32 %v1092, 0.0010405828
    %v1097 = vsub.f32 %v1095, %v1015
    %v1098 = vsub.f32 %v1096, %v1016
    %v1099 = vand.u32 2147483647, %v1097
    %v1100 = vand.u32 2147483647, %v1098
    %v1101 = vmul.f32 %v1099, 5.0
    %v1102 = vmul.f32 %v1100, 5.0
    %v1103 = vadd.f32 %v1101, 1.0
    %v1104 = vadd.f32 %v1102, 1.0
    %v1105 = vand.u32 2147483647, %v1018
    %v1106 = vand.u32 2147483647, %v1019
    %v1107 = vsub.f32 0.0, %v1105
    %v1108 = vsub.f32 0.0, %v1106
    %v1109 = vmul.f32 %v1107, 1.442695
    %v1110 = vpow.pop %v1109
    %v1111 = vmul.f32 %v1108, 1.442695
    %v1112 = vpow.pop %v1111
    %v1113 = vmax.f32 %v1018, 0.0
    %v1114 = vmax.f32 %v1019, 0.0
    %v1115 = vmul.f32 %v1018, %v1015
    %v1116 = vmul.f32 %v1019, %v1016
    %v1117 = vsub.f32 %v1113, %v1115
    %v1118 = vsub.f32 %v1114, %v1116
    %v1119 = vadd.f32 %v1110, 1.0
    %v1120 = vadd.f32 %v1112, 1.0
    %v1121 = vlog2.pop %v1119
    %v1122 = vmul.f32 %v1121, 0.6931472
    %v1123 = vlog2.pop %v1120
    %v1124 = vmul.f32 %v1123, 0.6931472
    %v1125 = vadd.f32 %v1117, %v1122
    %v1126 = vadd.f32 %v1118, %v1124
    %v1127 = vrcp.pop %v1119
    %v1128 = vmul.f32 1.0, %v1127
    %v1129 = vrcp.pop %v1120
    %v1130 = vmul.f32 1.0, %v1129
    %vm1131 = vcmp.ge.f32.partialorder %v1018, 0.0
    %vm1132 = vcmp.ge.f32.partialorder %v1019, 0.0
    %v1133 = vmul.f32 %v1110, %v1128
    %v1134 = vmul.f32 %v1112, %v1130
    %v1135 = vsel %vm1131, %v1128, %v1133
    %v1136 = vsel %vm1132, %v1130, %v1134
    %v1137 = vmul.f32 %v1135, %v1015
    %v1138 = vmul.f32 %v1136, %v1016
    %v1139 = vmul.f32 %v1137, %v1103
    %v1140 = vmul.f32 %v1138, %v1104
    %v1141 = vsel %vm100, %v1139, 0.0
    %v1142 = vsel %vm100, %v1140, 0.0
    %v1143 = vadd.f32 %v1141, %v1142
    %1144 = vadd.xlane.f32.xlu0 %v1143
    %v1145 = vpop.xlane.xlu0 %1144
    %v1146 = vrot.slane %v1145, 4
    %v1147 = vadd.f32 %v1145, %v1146
    %v1148 = vrot.slane %v1147, 2
    %v1149 = vadd.f32 %v1147, %v1148
    %v1150 = vrot.slane %v1149, 1
    %v1151 = vadd.f32 %v1149, %v1150
    %s1152 = vtos %v1151
    %v1153 = vadd.f32 %v1135, %v1015
    %v1154 = vadd.f32 %v1136, %v1016
    %v1155 = vmul.f32 %v1153, %v1103
    %v1156 = vmul.f32 %v1154, %v1104
    %v1157 = vsel %vm100, %v1155, 0.0
    %v1158 = vsel %vm100, %v1156, 0.0
    %v1159 = vadd.f32 %v1157, %v1158
    %1160 = vadd.xlane.f32.xlu0 %v1159
    %v1161 = vpop.xlane.xlu0 %1160
    %v1162 = vrot.slane %v1161, 4
    %v1163 = vadd.f32 %v1161, %v1162
    %v1164 = vrot.slane %v1163, 2
    %v1165 = vadd.f32 %v1163, %v1164
    %v1166 = vrot.slane %v1165, 1
    %v1167 = vadd.f32 %v1165, %v1166
    %s1168 = vtos %v1167
    %s1169 = sadd.f32 %s1152, 1.0
    %s1170 = ssub.f32 %s1168, %s1152
    %s1171 = sadd.f32 %s1170, 1.0
    %v1172 = vstv %s1171
    %v1173 = vrcp.pop %v1172
    %s1174 = vtos %v1173
    %s1175 = smul.f32 %s1169, %s1174
    %s1176 = ssub.f32 1.0, %s1175
    %v1177 = vsel %vm100, %v1125, 0.0
    %v1178 = vsel %vm100, %v1126, 0.0
    %v1179 = vadd.f32 %v1177, %v1178
    %1180 = vadd.xlane.f32.xlu0 %v1179
    %v1181 = vpop.xlane.xlu0 %1180
    %v1182 = vrot.slane %v1181, 4
    %v1183 = vadd.f32 %v1181, %v1182
    %v1184 = vrot.slane %v1183, 2
    %v1185 = vadd.f32 %v1183, %v1184
    %v1186 = vrot.slane %v1185, 1
    %v1187 = vadd.f32 %v1185, %v1186
    %s1188 = vtos %v1187
    %v1189 = vstv %s1188
    %v1190 = vadd.f32 %v1011, %v1189
    %v1191 = vstv %s1176
    %v1192 = vadd.f32 %v1013, %v1191
    %s1193 = scalar_lea.vmem [#allocation7], 80
    %v1194 = vld [vmem:[%s1193] sm:$0xff]
    %v1195 = vld [vmem:[%s1193 + $0x8] sm:$0xff]
    %s1196 = scalar_lea.vmem [#allocation4], 80
    %v1197 = vld [vmem:[%s1196] sm:$0xff]
    %v1198 = vld [vmem:[%s1196 + $0x8] sm:$0xff]
    %1199 = vmatprep.subr.mxu0 0.0
    %1200 = vmatpush1.msra.mxu0 %v266
    %1201 = vmatprep.subr.mxu0 0.0
    %1202 = vmatpush1.msra.mxu0 %v271
    %1203 = vmatprep.subr.mxu0 0.0
    %1204 = vmatpush1.msra.mxu0 0.0
    %1205 = vmatprep.subr.mxu0 0.0
    %1206 = vmatpush1.msra.mxu0 0.0
    %1207 = vmatprep.subr.mxu0 0.0
    %1208 = vmatpush1.msra.mxu0 0.0
    %1209 = vmatprep.subr.mxu0 0.0
    %1210 = vmatpush1.msra.mxu0 0.0
    %1211 = vmatprep.subr.mxu0 0.0
    %1212 = vmatpush1.msra.mxu0 0.0
    %1213 = vmatprep.subr.mxu0 0.0
    %1214 = vmatpush1.msra.mxu0 0.0
    %1215 = vmatprep.subr.mxu0 0.0
    %1216 = vmatpush1.msra.mxu0 0.0
    %1217 = vmatprep.subr.mxu0 0.0
    %1218 = vmatpush1.msra.mxu0 0.0
    %1219 = vmatprep.subr.mxu0 0.0
    %1220 = vmatpush1.msra.mxu0 0.0
    %1221 = vmatprep.subr.mxu0 0.0
    %1222 = vmatpush1.msra.mxu0 0.0
    %1223 = vmatprep.subr.mxu0 0.0
    %1224 = vmatpush1.msra.mxu0 0.0
    %1225 = vmatprep.subr.mxu0 0.0
    %1226 = vmatpush1.msra.mxu0 0.0
    %1227 = vmatprep.subr.mxu0 0.0
    %1228 = vmatpush1.msra.mxu0 0.0
    %1229 = vmatprep.subr.mxu0 0.0
    %1230 = vmatpush1.msra.mxu0 0.0
    %1231 = vmatprep.subr.mxu0 0.0
    %1232 = vmatpush1.msra.mxu0 0.0
    %1233 = vmatprep.subr.mxu0 0.0
    %1234 = vmatpush1.msra.mxu0 0.0
    %1235 = vmatprep.subr.mxu0 0.0
    %1236 = vmatpush1.msra.mxu0 0.0
    %1237 = vmatprep.subr.mxu0 0.0
    %1238 = vmatpush1.msra.mxu0 0.0
    %1239 = vmatprep.subr.mxu0 0.0
    %1240 = vmatpush1.msra.mxu0 0.0
    %1241 = vmatprep.subr.mxu0 0.0
    %1242 = vmatpush1.msra.mxu0 0.0
    %1243 = vmatprep.subr.mxu0 0.0
    %1244 = vmatpush1.msra.mxu0 0.0
    %1245 = vmatprep.subr.mxu0 0.0
    %1246 = vmatpush1.msra.mxu0 0.0
    %1247 = vmatprep.subr.mxu0 0.0
    %1248 = vmatpush1.msra.mxu0 0.0
    %1249 = vmatprep.subr.mxu0 0.0
    %1250 = vmatpush1.msra.mxu0 0.0
    %1251 = vmatprep.subr.mxu0 0.0
    %1252 = vmatpush1.msra.mxu0 0.0
    %1253 = vmatprep.subr.mxu0 0.0
    %1254 = vmatpush1.msra.mxu0 0.0
    %1255 = vmatprep.subr.mxu0 0.0
    %1256 = vmatpush1.msra.mxu0 0.0
    %1257 = vmatprep.subr.mxu0 0.0
    %1258 = vmatpush1.msra.mxu0 0.0
    %1259 = vmatprep.subr.mxu0 0.0
    %1260 = vmatpush1.msra.mxu0 0.0
    %1261 = vmatprep.subr.mxu0 0.0
    %1262 = vmatpush1.msra.mxu0 0.0
    %1263 = vmatprep.mubr.f32.mxu0 0.0
    %1264 = vmatmul.mubr.f32.gmra.mrb[0].mxu0 %v299
    %v1265 = vpop.f32.mrb[0].mxu0
    %v1266 = vadd.f32 0.0, %v1265
    %v1267 = vpop.f32.mrb[0].mxu0
    %1268 = vmatprep.mubr.f32.mxu0 0.0
    %1269 = vmatmul.mubr.f32.gmra.mrb[0].mxu0 %v302
    %v1270 = vpop.f32.mrb[0].mxu0
    %v1271 = vadd.f32 0.0, %v1270
    %v1272 = vpop.f32.mrb[0].mxu0
    %1273 = vdwg.mxu0
    %v1274 = vmul.f32 %v1266, 0.0010405828
    %v1275 = vmul.f32 %v1271, 0.0010405828
    %v1276 = vsub.f32 %v1274, %v1194
    %v1277 = vsub.f32 %v1275, %v1195
    %v1278 = vand.u32 2147483647, %v1276
    %v1279 = vand.u32 2147483647, %v1277
    %v1280 = vmul.f32 %v1278, 5.0
    %v1281 = vmul.f32 %v1279, 5.0
    %v1282 = vadd.f32 %v1280, 1.0
    %v1283 = vadd.f32 %v1281, 1.0
    %v1284 = vand.u32 2147483647, %v1197
    %v1285 = vand.u32 2147483647, %v1198
    %v1286 = vsub.f32 0.0, %v1284
    %v1287 = vsub.f32 0.0, %v1285
    %v1288 = vmul.f32 %v1286, 1.442695
    %v1289 = vpow.pop %v1288
    %v1290 = vmul.f32 %v1287, 1.442695
    %v1291 = vpow.pop %v1290
    %v1292 = vmax.f32 %v1197, 0.0
    %v1293 = vmax.f32 %v1198, 0.0
    %v1294 = vmul.f32 %v1197, %v1194
    %v1295 = vmul.f32 %v1198, %v1195
    %v1296 = vsub.f32 %v1292, %v1294
    %v1297 = vsub.f32 %v1293, %v1295
    %v1298 = vadd.f32 %v1289, 1.0
    %v1299 = vadd.f32 %v1291, 1.0
    %v1300 = vlog2.pop %v1298
    %v1301 = vmul.f32 %v1300, 0.6931472
    %v1302 = vlog2.pop %v1299
    %v1303 = vmul.f32 %v1302, 0.6931472
    %v1304 = vadd.f32 %v1296, %v1301
    %v1305 = vadd.f32 %v1297, %v1303
    %v1306 = vrcp.pop %v1298
    %v1307 = vmul.f32 1.0, %v1306
    %v1308 = vrcp.pop %v1299
    %v1309 = vmul.f32 1.0, %v1308
    %vm1310 = vcmp.ge.f32.partialorder %v1197, 0.0
    %vm1311 = vcmp.ge.f32.partialorder %v1198, 0.0
    %v1312 = vmul.f32 %v1289, %v1307
    %v1313 = vmul.f32 %v1291, %v1309
    %v1314 = vsel %vm1310, %v1307, %v1312
    %v1315 = vsel %vm1311, %v1309, %v1313
    %v1316 = vmul.f32 %v1314, %v1194
    %v1317 = vmul.f32 %v1315, %v1195
    %v1318 = vmul.f32 %v1316, %v1282
    %v1319 = vmul.f32 %v1317, %v1283
    %v1320 = vsel %vm100, %v1318, 0.0
    %v1321 = vsel %vm100, %v1319, 0.0
    %v1322 = vadd.f32 %v1320, %v1321
    %1323 = vadd.xlane.f32.xlu0 %v1322
    %v1324 = vpop.xlane.xlu0 %1323
    %v1325 = vrot.slane %v1324, 4
    %v1326 = vadd.f32 %v1324, %v1325
    %v1327 = vrot.slane %v1326, 2
    %v1328 = vadd.f32 %v1326, %v1327
    %v1329 = vrot.slane %v1328, 1
    %v1330 = vadd.f32 %v1328, %v1329
    %s1331 = vtos %v1330
    %v1332 = vadd.f32 %v1314, %v1194
    %v1333 = vadd.f32 %v1315, %v1195
    %v1334 = vmul.f32 %v1332, %v1282
    %v1335 = vmul.f32 %v1333, %v1283
    %v1336 = vsel %vm100, %v1334, 0.0
    %v1337 = vsel %vm100, %v1335, 0.0
    %v1338 = vadd.f32 %v1336, %v1337
    %1339 = vadd.xlane.f32.xlu0 %v1338
    %v1340 = vpop.xlane.xlu0 %1339
    %v1341 = vrot.slane %v1340, 4
    %v1342 = vadd.f32 %v1340, %v1341
    %v1343 = vrot.slane %v1342, 2
    %v1344 = vadd.f32 %v1342, %v1343
    %v1345 = vrot.slane %v1344, 1
    %v1346 = vadd.f32 %v1344, %v1345
    %s1347 = vtos %v1346
    %s1348 = sadd.f32 %s1331, 1.0
    %s1349 = ssub.f32 %s1347, %s1331
    %s1350 = sadd.f32 %s1349, 1.0
    %v1351 = vstv %s1350
    %v1352 = vrcp.pop %v1351
    %s1353 = vtos %v1352
    %s1354 = smul.f32 %s1348, %s1353
    %s1355 = ssub.f32 1.0, %s1354
    %v1356 = vsel %vm100, %v1304, 0.0
    %v1357 = vsel %vm100, %v1305, 0.0
    %v1358 = vadd.f32 %v1356, %v1357
    %1359 = vadd.xlane.f32.xlu0 %v1358
    %v1360 = vpop.xlane.xlu0 %1359
    %v1361 = vrot.slane %v1360, 4
    %v1362 = vadd.f32 %v1360, %v1361
    %v1363 = vrot.slane %v1362, 2
    %v1364 = vadd.f32 %v1362, %v1363
    %v1365 = vrot.slane %v1364, 1
    %v1366 = vadd.f32 %v1364, %v1365
    %s1367 = vtos %v1366
    %v1368 = vstv %s1367
    %v1369 = vadd.f32 %v1190, %v1368
    %v1370 = vstv %s1355
    %v1371 = vadd.f32 %v1192, %v1370
    %s1372 = scalar_lea.vmem [#allocation7], 96
    %v1373 = vld [vmem:[%s1372] sm:$0xff]
    %v1374 = vld [vmem:[%s1372 + $0x8] sm:$0xff]
    %s1375 = scalar_lea.vmem [#allocation4], 96
    %v1376 = vld [vmem:[%s1375] sm:$0xff]
    %v1377 = vld [vmem:[%s1375 + $0x8] sm:$0xff]
    %1378 = vmatprep.subr.mxu0 0.0
    %1379 = vmatpush1.msra.mxu0 %v276
    %1380 = vmatprep.subr.mxu0 0.0
    %1381 = vmatpush1.msra.mxu0 %v281
    %1382 = vmatprep.subr.mxu0 0.0
    %1383 = vmatpush1.msra.mxu0 0.0
    %1384 = vmatprep.subr.mxu0 0.0
    %1385 = vmatpush1.msra.mxu0 0.0
    %1386 = vmatprep.subr.mxu0 0.0
    %1387 = vmatpush1.msra.mxu0 0.0
    %1388 = vmatprep.subr.mxu0 0.0
    %1389 = vmatpush1.msra.mxu0 0.0
    %1390 = vmatprep.subr.mxu0 0.0
    %1391 = vmatpush1.msra.mxu0 0.0
    %1392 = vmatprep.subr.mxu0 0.0
    %1393 = vmatpush1.msra.mxu0 0.0
    %1394 = vmatprep.subr.mxu0 0.0
    %1395 = vmatpush1.msra.mxu0 0.0
    %1396 = vmatprep.subr.mxu0 0.0
    %1397 = vmatpush1.msra.mxu0 0.0
    %1398 = vmatprep.subr.mxu0 0.0
    %1399 = vmatpush1.msra.mxu0 0.0
    %1400 = vmatprep.subr.mxu0 0.0
    %1401 = vmatpush1.msra.mxu0 0.0
    %1402 = vmatprep.subr.mxu0 0.0
    %1403 = vmatpush1.msra.mxu0 0.0
    %1404 = vmatprep.subr.mxu0 0.0
    %1405 = vmatpush1.msra.mxu0 0.0
    %1406 = vmatprep.subr.mxu0 0.0
    %1407 = vmatpush1.msra.mxu0 0.0
    %1408 = vmatprep.subr.mxu0 0.0
    %1409 = vmatpush1.msra.mxu0 0.0
    %1410 = vmatprep.subr.mxu0 0.0
    %1411 = vmatpush1.msra.mxu0 0.0
    %1412 = vmatprep.subr.mxu0 0.0
    %1413 = vmatpush1.msra.mxu0 0.0
    %1414 = vmatprep.subr.mxu0 0.0
    %1415 = vmatpush1.msra.mxu0 0.0
    %1416 = vmatprep.subr.mxu0 0.0
    %1417 = vmatpush1.msra.mxu0 0.0
    %1418 = vmatprep.subr.mxu0 0.0
    %1419 = vmatpush1.msra.mxu0 0.0
    %1420 = vmatprep.subr.mxu0 0.0
    %1421 = vmatpush1.msra.mxu0 0.0
    %1422 = vmatprep.subr.mxu0 0.0
    %1423 = vmatpush1.msra.mxu0 0.0
    %1424 = vmatprep.subr.mxu0 0.0
    %1425 = vmatpush1.msra.mxu0 0.0
    %1426 = vmatprep.subr.mxu0 0.0
    %1427 = vmatpush1.msra.mxu0 0.0
    %1428 = vmatprep.subr.mxu0 0.0
    %1429 = vmatpush1.msra.mxu0 0.0
    %1430 = vmatprep.subr.mxu0 0.0
    %1431 = vmatpush1.msra.mxu0 0.0
    %1432 = vmatprep.subr.mxu0 0.0
    %1433 = vmatpush1.msra.mxu0 0.0
    %1434 = vmatprep.subr.mxu0 0.0
    %1435 = vmatpush1.msra.mxu0 0.0
    %1436 = vmatprep.subr.mxu0 0.0
    %1437 = vmatpush1.msra.mxu0 0.0
    %1438 = vmatprep.subr.mxu0 0.0
    %1439 = vmatpush1.msra.mxu0 0.0
    %1440 = vmatprep.subr.mxu0 0.0
    %1441 = vmatpush1.msra.mxu0 0.0
    %1442 = vmatprep.mubr.f32.mxu0 0.0
    %1443 = vmatmul.mubr.f32.gmra.mrb[0].mxu0 %v299
    %v1444 = vpop.f32.mrb[0].mxu0
    %v1445 = vadd.f32 0.0, %v1444
    %v1446 = vpop.f32.mrb[0].mxu0
    %1447 = vmatprep.mubr.f32.mxu0 0.0
    %1448 = vmatmul.mubr.f32.gmra.mrb[0].mxu0 %v302
    %v1449 = vpop.f32.mrb[0].mxu0
    %v1450 = vadd.f32 0.0, %v1449
    %v1451 = vpop.f32.mrb[0].mxu0
    %1452 = vdwg.mxu0
    %v1453 = vmul.f32 %v1445, 0.0010405828
    %v1454 = vmul.f32 %v1450, 0.0010405828
    %v1455 = vsub.f32 %v1453, %v1373
    %v1456 = vsub.f32 %v1454, %v1374
    %v1457 = vand.u32 2147483647, %v1455
    %v1458 = vand.u32 2147483647, %v1456
    %v1459 = vmul.f32 %v1457, 5.0
    %v1460 = vmul.f32 %v1458, 5.0
    %v1461 = vadd.f32 %v1459, 1.0
    %v1462 = vadd.f32 %v1460, 1.0
    %v1463 = vand.u32 2147483647, %v1376
    %v1464 = vand.u32 2147483647, %v1377
    %v1465 = vsub.f32 0.0, %v1463
    %v1466 = vsub.f32 0.0, %v1464
    %v1467 = vmul.f32 %v1465, 1.442695
    %v1468 = vpow.pop %v1467
    %v1469 = vmul.f32 %v1466, 1.442695
    %v1470 = vpow.pop %v1469
    %v1471 = vmax.f32 %v1376, 0.0
    %v1472 = vmax.f32 %v1377, 0.0
    %v1473 = vmul.f32 %v1376, %v1373
    %v1474 = vmul.f32 %v1377, %v1374
    %v1475 = vsub.f32 %v1471, %v1473
    %v1476 = vsub.f32 %v1472, %v1474
    %v1477 = vadd.f32 %v1468, 1.0
    %v1478 = vadd.f32 %v1470, 1.0
    %v1479 = vlog2.pop %v1477
    %v1480 = vmul.f32 %v1479, 0.6931472
    %v1481 = vlog2.pop %v1478
    %v1482 = vmul.f32 %v1481, 0.6931472
    %v1483 = vadd.f32 %v1475, %v1480
    %v1484 = vadd.f32 %v1476, %v1482
    %v1485 = vrcp.pop %v1477
    %v1486 = vmul.f32 1.0, %v1485
    %v1487 = vrcp.pop %v1478
    %v1488 = vmul.f32 1.0, %v1487
    %vm1489 = vcmp.ge.f32.partialorder %v1376, 0.0
    %vm1490 = vcmp.ge.f32.partialorder %v1377, 0.0
    %v1491 = vmul.f32 %v1468, %v1486
    %v1492 = vmul.f32 %v1470, %v1488
    %v1493 = vsel %vm1489, %v1486, %v1491
    %v1494 = vsel %vm1490, %v1488, %v1492
    %v1495 = vmul.f32 %v1493, %v1373
    %v1496 = vmul.f32 %v1494, %v1374
    %v1497 = vmul.f32 %v1495, %v1461
    %v1498 = vmul.f32 %v1496, %v1462
    %v1499 = vsel %vm100, %v1497, 0.0
    %v1500 = vsel %vm100, %v1498, 0.0
    %v1501 = vadd.f32 %v1499, %v1500
    %1502 = vadd.xlane.f32.xlu0 %v1501
    %v1503 = vpop.xlane.xlu0 %1502
    %v1504 = vrot.slane %v1503, 4
    %v1505 = vadd.f32 %v1503, %v1504
    %v1506 = vrot.slane %v1505, 2
    %v1507 = vadd.f32 %v1505, %v1506
    %v1508 = vrot.slane %v1507, 1
    %v1509 = vadd.f32 %v1507, %v1508
    %s1510 = vtos %v1509
    %v1511 = vadd.f32 %v1493, %v1373
    %v1512 = vadd.f32 %v1494, %v1374
    %v1513 = vmul.f32 %v1511, %v1461
    %v1514 = vmul.f32 %v1512, %v1462
    %v1515 = vsel %vm100, %v1513, 0.0
    %v1516 = vsel %vm100, %v1514, 0.0
    %v1517 = vadd.f32 %v1515, %v1516
    %1518 = vadd.xlane.f32.xlu0 %v1517
    %v1519 = vpop.xlane.xlu0 %1518
    %v1520 = vrot.slane %v1519, 4
    %v1521 = vadd.f32 %v1519, %v1520
    %v1522 = vrot.slane %v1521, 2
    %v1523 = vadd.f32 %v1521, %v1522
    %v1524 = vrot.slane %v1523, 1
    %v1525 = vadd.f32 %v1523, %v1524
    %s1526 = vtos %v1525
    %s1527 = sadd.f32 %s1510, 1.0
    %s1528 = ssub.f32 %s1526, %s1510
    %s1529 = sadd.f32 %s1528, 1.0
    %v1530 = vstv %s1529
    %v1531 = vrcp.pop %v1530
    %s1532 = vtos %v1531
    %s1533 = smul.f32 %s1527, %s1532
    %s1534 = ssub.f32 1.0, %s1533
    %v1535 = vsel %vm100, %v1483, 0.0
    %v1536 = vsel %vm100, %v1484, 0.0
    %v1537 = vadd.f32 %v1535, %v1536
    %1538 = vadd.xlane.f32.xlu0 %v1537
    %v1539 = vpop.xlane.xlu0 %1538
    %v1540 = vrot.slane %v1539, 4
    %v1541 = vadd.f32 %v1539, %v1540
    %v1542 = vrot.slane %v1541, 2
    %v1543 = vadd.f32 %v1541, %v1542
    %v1544 = vrot.slane %v1543, 1
    %v1545 = vadd.f32 %v1543, %v1544
    %s1546 = vtos %v1545
    %v1547 = vstv %s1546
    %v1548 = vadd.f32 %v1369, %v1547
    %v1549 = vstv %s1534
    %v1550 = vadd.f32 %v1371, %v1549
    %s1551 = scalar_lea.vmem [#allocation7], 112
    %v1552 = vld [vmem:[%s1551] sm:$0xff]
    %v1553 = vld [vmem:[%s1551 + $0x8] sm:$0xff]
    %s1554 = scalar_lea.vmem [#allocation4], 112
    %v1555 = vld [vmem:[%s1554] sm:$0xff]
    %v1556 = vld [vmem:[%s1554 + $0x8] sm:$0xff]
    %1557 = vmatprep.subr.mxu0 0.0
    %1558 = vmatpush1.msra.mxu0 %v286
    %1559 = vmatprep.subr.mxu0 0.0
    %1560 = vmatpush1.msra.mxu0 %v291
    %1561 = vmatprep.subr.mxu0 0.0
    %1562 = vmatpush1.msra.mxu0 0.0
    %1563 = vmatprep.subr.mxu0 0.0
    %1564 = vmatpush1.msra.mxu0 0.0
    %1565 = vmatprep.subr.mxu0 0.0
    %1566 = vmatpush1.msra.mxu0 0.0
    %1567 = vmatprep.subr.mxu0 0.0
    %1568 = vmatpush1.msra.mxu0 0.0
    %1569 = vmatprep.subr.mxu0 0.0
    %1570 = vmatpush1.msra.mxu0 0.0
    %1571 = vmatprep.subr.mxu0 0.0
    %1572 = vmatpush1.msra.mxu0 0.0
    %1573 = vmatprep.subr.mxu0 0.0
    %1574 = vmatpush1.msra.mxu0 0.0
    %1575 = vmatprep.subr.mxu0 0.0
    %1576 = vmatpush1.msra.mxu0 0.0
    %1577 = vmatprep.subr.mxu0 0.0
    %1578 = vmatpush1.msra.mxu0 0.0
    %1579 = vmatprep.subr.mxu0 0.0
    %1580 = vmatpush1.msra.mxu0 0.0
    %1581 = vmatprep.subr.mxu0 0.0
    %1582 = vmatpush1.msra.mxu0 0.0
    %1583 = vmatprep.subr.mxu0 0.0
    %1584 = vmatpush1.msra.mxu0 0.0
    %1585 = vmatprep.subr.mxu0 0.0
    %1586 = vmatpush1.msra.mxu0 0.0
    %1587 = vmatprep.subr.mxu0 0.0
    %1588 = vmatpush1.msra.mxu0 0.0
    %1589 = vmatprep.subr.mxu0 0.0
    %1590 = vmatpush1.msra.mxu0 0.0
    %1591 = vmatprep.subr.mxu0 0.0
    %1592 = vmatpush1.msra.mxu0 0.0
    %1593 = vmatprep.subr.mxu0 0.0
    %1594 = vmatpush1.msra.mxu0 0.0
    %1595 = vmatprep.subr.mxu0 0.0
    %1596 = vmatpush1.msra.mxu0 0.0
    %1597 = vmatprep.subr.mxu0 0.0
    %1598 = vmatpush1.msra.mxu0 0.0
    %1599 = vmatprep.subr.mxu0 0.0
    %1600 = vmatpush1.msra.mxu0 0.0
    %1601 = vmatprep.subr.mxu0 0.0
    %1602 = vmatpush1.msra.mxu0 0.0
    %1603 = vmatprep.subr.mxu0 0.0
    %1604 = vmatpush1.msra.mxu0 0.0
    %1605 = vmatprep.subr.mxu0 0.0
    %1606 = vmatpush1.msra.mxu0 0.0
    %1607 = vmatprep.subr.mxu0 0.0
    %1608 = vmatpush1.msra.mxu0 0.0
    %1609 = vmatprep.subr.mxu0 0.0
    %1610 = vmatpush1.msra.mxu0 0.0
    %1611 = vmatprep.subr.mxu0 0.0
    %1612 = vmatpush1.msra.mxu0 0.0
    %1613 = vmatprep.subr.mxu0 0.0
    %1614 = vmatpush1.msra.mxu0 0.0
    %1615 = vmatprep.subr.mxu0 0.0
    %1616 = vmatpush1.msra.mxu0 0.0
    %1617 = vmatprep.subr.mxu0 0.0
    %1618 = vmatpush1.msra.mxu0 0.0
    %1619 = vmatprep.subr.mxu0 0.0
    %1620 = vmatpush1.msra.mxu0 0.0
    %1621 = vmatprep.mubr.f32.mxu0 0.0
    %1622 = vmatmul.mubr.f32.gmra.mrb[0].mxu0 %v299
    %v1623 = vpop.f32.mrb[0].mxu0
    %v1624 = vadd.f32 0.0, %v1623
    %v1625 = vpop.f32.mrb[0].mxu0
    %1626 = vmatprep.mubr.f32.mxu0 0.0
    %1627 = vmatmul.mubr.f32.gmra.mrb[0].mxu0 %v302
    %v1628 = vpop.f32.mrb[0].mxu0
    %v1629 = vadd.f32 0.0, %v1628
    %v1630 = vpop.f32.mrb[0].mxu0
    %1631 = vdwg.mxu0
    %v1632 = vmul.f32 %v1624, 0.0010405828
    %v1633 = vmul.f32 %v1629, 0.0010405828
    %v1634 = vsub.f32 %v1632, %v1552
    %v1635 = vsub.f32 %v1633, %v1553
    %v1636 = vand.u32 2147483647, %v1634
    %v1637 = vand.u32 2147483647, %v1635
    %v1638 = vmul.f32 %v1636, 5.0
    %v1639 = vmul.f32 %v1637, 5.0
    %v1640 = vadd.f32 %v1638, 1.0
    %v1641 = vadd.f32 %v1639, 1.0
    %v1642 = vand.u32 2147483647, %v1555
    %v1643 = vand.u32 2147483647, %v1556
    %v1644 = vsub.f32 0.0, %v1642
    %v1645 = vsub.f32 0.0, %v1643
    %v1646 = vmul.f32 %v1644, 1.442695
    %v1647 = vpow.pop %v1646
    %v1648 = vmul.f32 %v1645, 1.442695
    %v1649 = vpow.pop %v1648
    %v1650 = vmax.f32 %v1555, 0.0
    %v1651 = vmax.f32 %v1556, 0.0
    %v1652 = vmul.f32 %v1555, %v1552
    %v1653 = vmul.f32 %v1556, %v1553
    %v1654 = vsub.f32 %v1650, %v1652
    %v1655 = vsub.f32 %v1651, %v1653
    %v1656 = vadd.f32 %v1647, 1.0
    %v1657 = vadd.f32 %v1649, 1.0
    %v1658 = vlog2.pop %v1656
    %v1659 = vmul.f32 %v1658, 0.6931472
    %v1660 = vlog2.pop %v1657
    %v1661 = vmul.f32 %v1660, 0.6931472
    %v1662 = vadd.f32 %v1654, %v1659
    %v1663 = vadd.f32 %v1655, %v1661
    %v1664 = vrcp.pop %v1656
    %v1665 = vmul.f32 1.0, %v1664
    %v1666 = vrcp.pop %v1657
    %v1667 = vmul.f32 1.0, %v1666
    %vm1668 = vcmp.ge.f32.partialorder %v1555, 0.0
    %vm1669 = vcmp.ge.f32.partialorder %v1556, 0.0
    %v1670 = vmul.f32 %v1647, %v1665
    %v1671 = vmul.f32 %v1649, %v1667
    %v1672 = vsel %vm1668, %v1665, %v1670
    %v1673 = vsel %vm1669, %v1667, %v1671
    %v1674 = vmul.f32 %v1672, %v1552
    %v1675 = vmul.f32 %v1673, %v1553
    %v1676 = vmul.f32 %v1674, %v1640
    %v1677 = vmul.f32 %v1675, %v1641
    %v1678 = vsel %vm100, %v1676, 0.0
    %v1679 = vsel %vm100, %v1677, 0.0
    %v1680 = vadd.f32 %v1678, %v1679
    %1681 = vadd.xlane.f32.xlu0 %v1680
    %v1682 = vpop.xlane.xlu0 %1681
    %v1683 = vrot.slane %v1682, 4
    %v1684 = vadd.f32 %v1682, %v1683
    %v1685 = vrot.slane %v1684, 2
    %v1686 = vadd.f32 %v1684, %v1685
    %v1687 = vrot.slane %v1686, 1
    %v1688 = vadd.f32 %v1686, %v1687
    %s1689 = vtos %v1688
    %v1690 = vadd.f32 %v1672, %v1552
    %v1691 = vadd.f32 %v1673, %v1553
    %v1692 = vmul.f32 %v1690, %v1640
    %v1693 = vmul.f32 %v1691, %v1641
    %v1694 = vsel %vm100, %v1692, 0.0
    %v1695 = vsel %vm100, %v1693, 0.0
    %v1696 = vadd.f32 %v1694, %v1695
    %1697 = vadd.xlane.f32.xlu0 %v1696
    %v1698 = vpop.xlane.xlu0 %1697
    %v1699 = vrot.slane %v1698, 4
    %v1700 = vadd.f32 %v1698, %v1699
    %v1701 = vrot.slane %v1700, 2
    %v1702 = vadd.f32 %v1700, %v1701
    %v1703 = vrot.slane %v1702, 1
    %v1704 = vadd.f32 %v1702, %v1703
    %s1705 = vtos %v1704
    %s1706 = sadd.f32 %s1689, 1.0
    %s1707 = ssub.f32 %s1705, %s1689
    %s1708 = sadd.f32 %s1707, 1.0
    %v1709 = vstv %s1708
    %v1710 = vrcp.pop %v1709
    %s1711 = vtos %v1710
    %s1712 = smul.f32 %s1706, %s1711
    %s1713 = ssub.f32 1.0, %s1712
    %v1714 = vsel %vm100, %v1662, 0.0
    %v1715 = vsel %vm100, %v1663, 0.0
    %v1716 = vadd.f32 %v1714, %v1715
    %1717 = vadd.xlane.f32.xlu0 %v1716
    %v1718 = vpop.xlane.xlu0 %1717
    %v1719 = vrot.slane %v1718, 4
    %v1720 = vadd.f32 %v1718, %v1719
    %v1721 = vrot.slane %v1720, 2
    %v1722 = vadd.f32 %v1720, %v1721
    %v1723 = vrot.slane %v1722, 1
    %v1724 = vadd.f32 %v1722, %v1723
    %s1725 = vtos %v1724
    %v1726 = vstv %s1725
    %v1727 = vadd.f32 %v1548, %v1726
    %v1728 = vstv %s1713
    %v1729 = vadd.f32 %v1550, %v1728
    %v1730 = vld [vmem:[#allocation2] sm:$0x1]
    %v1731 = vadd.f32 %v1730, %v1727
    %vm1732 = vcmask 0
    %1733 = vst.msk [vmem:[#allocation2] sm:$0x1] %vm1732, %v1731
    %v1734 = vld [vmem:[#allocation3] sm:$0x1]
    %v1735 = vadd.f32 %v1734, %v1729
    %1736 = vst.msk [vmem:[#allocation3] sm:$0x1] %vm1732, %v1735
    %v1737 = vld [vmem:[#allocation2] sm:$0x1]
    %v1738 = vmul.f32 %v1737, 0.00048828125
    %v1739 = vld [vmem:[#allocation3] sm:$0x1]
    %v1740 = vmul.f32 %v1739, 0.125
    %v1741 = vadd.f32 %v1738, %v1740
    %1742 = vst.msk [vmem:[#allocation12] sm:$0x1] %vm1732, %v1741
    // Predicated region
    $region38: #{tpu_custom_call.1} parent=1 // pred_check
      _
    $region39: #{tpu_custom_call.1} parent=1 // pred_check_branch
      %1744 = sbr.rel (0) target = $region41
    $region40: #{tpu_custom_call.1} parent=1 // pred_region
      %s1746 = ssub.s32 16, 16
      %1747 = vsyncadd [#allocation6], %s1746
      %s1749 = sshll.u32 [#allocation12], 4
      %s1750 = int_to_ptr.vmem [resolvable:$true] %s1749
      %1752 = dma.vmem_to_hbm [thread:$0]  %s1750, 16, %s4, [#allocation6]
    $region41: #{tpu_custom_call.1} parent=1 // pred_fallthru
      _
    // Predicated region
    $region42: #{tpu_custom_call.1} parent=1 // pred_check
      _
    $region43: #{tpu_custom_call.1} parent=1 // pred_check_branch
      %1754 = sbr.rel (0) target = $region45
    $region44: #{tpu_custom_call.1} parent=1 // pred_region
      %1755 = dma.done [#allocation6], 16
    $region45: #{tpu_custom_call.1} parent=1 // pred_fallthru
      _
    %1756 = vsyncpa [#allocation5], 1
    %1757 = vsyncpa [#allocation8], 1
    %1758 = vsyncpa [#allocation11], 1
    %1759 = vsyncpa [#allocation6], 1

</llo_original>
